<compile_context>
chip_gen: v7x
topology: tpu7x:2x2x1
jax: 0.10.0
libtpu: 0.0.40
codegen_flags: <defaults>
</compile_context>

<pallas_src>
import functools

import jax
import jax.numpy as jnp
from jax import lax
from jax.experimental import pallas as pl
from jax.experimental.pallas import tpu as pltpu

NEG_SLOPE = 0.1  # nn.LeakyReLU(0.1)


def _leaky(v):
    return jnp.where(v > 0, v, NEG_SLOPE * v)


# --------------------------- Fused forward kernel -----------------------------
def _fused_kernel(*refs, n_lin1, n_gnn, n_lin2):
    """refs = (x, A, At, <params...>, out).

    Param order (all f32, packed once at init):
      linear_list1: per layer  wT (in,out), b (1,out)
      gnn layers:   per layer  w_v2e (Din,H*Dout), w_v (Din,H*Dout),
                               w_e2v block-diag (H*Dout,H*Dout),
                               a1b (H,H*Dout), a2b (H,H*Dout),
                               lin_wT (H*Dout,Dout)
      linear_list2: per layer  wT (in,out), b (1,out)
    """
    out_ref = refs[-1]
    it = iter(refs[:-1])

    x_ref = next(it)
    a_ref = next(it)
    at_ref = next(it)

    x = x_ref[...]                                  # (N, D0)
    A = a_ref[...]                                  # (N, E)
    At = at_ref[...]                                # (E, N)

    # Hyperedge degrees -- computed once for the whole forward (A is constant).
    # NOTE: no epsilon, matching the PyTorch reference (empty hyperedges -> inf).
    deg = jnp.sum(At, axis=-1, keepdims=True)       # (E, 1)

    # ---- linear_list1 (+ leakyrelu; dropout=None is identity) ----
    for _ in range(n_lin1):
        wt = next(it)[...]                          # (in, out)  pre-transposed
        b = next(it)[...]                           # (1, out)
        x = _leaky(jnp.dot(x, wt, preferred_element_type=jnp.float32) + b)

    # ---- gnn_list (4 heads fused per layer, + model-level leakyrelu) ----
    for _ in range(n_gnn):
        w_v2e = next(it)[...]                       # (Din, H*Dout)
        w_v = next(it)[...]                         # (Din, H*Dout)
        w_e2v = next(it)[...]                       # (H*Dout, H*Dout) block-diag
        a1b = next(it)[...]                         # (H, H*Dout)
        a2b = next(it)[...]                         # (H, H*Dout)
        lin_wt = next(it)[...]                      # (H*Dout, Dout)
        dout = lin_wt.shape[1]
        heads = lin_wt.shape[0] // dout

        # Shared across heads (computed once per layer).
        Ax = jnp.dot(At, x, preferred_element_type=jnp.float32)          # (E, Din)
        e_all = jnp.dot(Ax, w_v2e, preferred_element_type=jnp.float32)   # (E, H*Dout)
        e_all = e_all / deg
        ew_all = jnp.dot(e_all, w_e2v, preferred_element_type=jnp.float32)  # (E, H*Dout)
        xw_all = jnp.dot(x, w_v, preferred_element_type=jnp.float32)        # (N, H*Dout)

        # edge score per head: (e_h @ w_e2v_h @ a2_h)^T  -> row of (H, E)
        edge_s = lax.dot_general(a2b, ew_all, (((1,), (1,)), ((), ())),
                                 preferred_element_type=jnp.float32)     # (H, E)
        # node score per head: x @ w_v_h @ a1_h           -> column of (N, H)
        node_s = lax.dot_general(xw_all, a1b, (((1,), (1,)), ((), ())),
                                 preferred_element_type=jnp.float32)     # (N, H)

        outs = []
        for h in range(heads):
            Hm = edge_s[h:h + 1, :] + node_s[:, h:h + 1]                 # (N, E)
            Hm = jnp.tanh(Hm / 8.0) * 8.0
            Hm = _leaky(Hm)
            Hm = jnp.exp(Hm) * A
            Hm = Hm / jnp.sum(Hm, axis=-1, keepdims=True)
            ew_h = ew_all[:, h * dout:(h + 1) * dout]                    # (E, Dout)
            # (Hm @ e_h) @ w_e2v_h == Hm @ ew_h  (reuse ew, one fewer matmul)
            outs.append(_leaky(jnp.dot(Hm, ew_h,
                                       preferred_element_type=jnp.float32)))
        cat = jnp.concatenate(outs, axis=-1)                             # (N, H*Dout)
        # GNNlayer.linear has no bias; Model.forward's leakyrelu fused here.
        x = _leaky(jnp.dot(cat, lin_wt, preferred_element_type=jnp.float32))

    # ---- linear_list2 (no activation) ----
    for _ in range(n_lin2):
        wt = next(it)[...]
        b = next(it)[...]
        x = jnp.dot(x, wt, preferred_element_type=jnp.float32) + b

    out_ref[...] = x


# --------------------------- Model forward -------------------------------------
def model_forward(x, A, params):
    n = x.shape[0]
    At = jnp.transpose(A).astype(jnp.float32)   # once per forward (A is reused)

    flat = [x.astype(jnp.float32), A.astype(jnp.float32), At]
    for wt, b in params["lin1"]:
        flat += [wt, b]
    for g in params["gnn"]:
        flat += [g["w_v2e"], g["w_v"], g["w_e2v_bd"], g["a1b"], g["a2b"],
                 g["lin_wt"]]
    for wt, b in params["lin2"]:
        flat += [wt, b]

    if params["lin2"]:
        out_dim = params["lin2"][-1][0].shape[1]
    elif params["gnn"]:
        out_dim = params["gnn"][-1]["lin_wt"].shape[1]
    else:
        out_dim = params["lin1"][-1][0].shape[1]

    kernel = functools.partial(_fused_kernel,
                               n_lin1=len(params["lin1"]),
                               n_gnn=len(params["gnn"]),
                               n_lin2=len(params["lin2"]))
    vmem = pl.BlockSpec(memory_space=pltpu.MemorySpace.VMEM)
    out = pl.pallas_call(
        kernel,
        out_shape=jax.ShapeDtypeStruct((n, out_dim), jnp.float32),
        in_specs=[vmem] * len(flat),
        out_specs=vmem,
    )(*flat)
    penalty_term = []   # Model.forward always returns an empty list
    return out, penalty_term


# --------------------------- Parameter init ------------------------------------
def init_params(key, linear_list1, linear_list2, gnn_list, num_heads=4):
    """Weights are generated per-head / torch-style then packed ONCE into the
    kernel-ready layout (pre-transposed linears, head-stacked / block-diagonal
    GNN weights). No per-forward reshapes or transposes remain."""

    def nk():
        nonlocal key
        key, sub = jax.random.split(key)
        return sub

    def make_linear(din, dout):
        # stored pre-transposed (din, dout) so the kernel does x @ w directly
        w = jax.random.normal(nk(), (din, dout), jnp.float32) / jnp.sqrt(din)
        b = jax.random.normal(nk(), (1, dout), jnp.float32) * 0.01
        return w, b

    params = {"lin1": [], "lin2": [], "gnn": []}
    for i in range(len(linear_list1) - 1):
        params["lin1"].append(make_linear(linear_list1[i], linear_list1[i + 1]))
    for i in range(len(linear_list2) - 1):
        params["lin2"].append(make_linear(linear_list2[i], linear_list2[i + 1]))

    for i in range(len(gnn_list) - 1):
        din, dout = gnn_list[i], gnn_list[i + 1]
        H = num_heads
        w_v2e_h = [jax.random.normal(nk(), (din, dout), jnp.float32) / jnp.sqrt(din)
                   for _ in range(H)]
        w_v_h = [jax.random.normal(nk(), (din, dout), jnp.float32) / jnp.sqrt(din)
                 for _ in range(H)]
        w_e2v_h = [jax.random.normal(nk(), (dout, dout), jnp.float32) / jnp.sqrt(dout)
                   for _ in range(H)]
        a1_h = [jax.random.normal(nk(), (1, dout), jnp.float32) / jnp.sqrt(dout)
                for _ in range(H)]
        a2_h = [jax.random.normal(nk(), (1, dout), jnp.float32) / jnp.sqrt(dout)
                for _ in range(H)]
        # GNNlayer.linear (no bias), stored pre-transposed: (H*dout, dout)
        lin_wt = (jax.random.normal(nk(), (dout * H, dout), jnp.float32)
                  / jnp.sqrt(dout * H))

        params["gnn"].append({
            "w_v2e": jnp.concatenate(w_v2e_h, axis=1),                    # (din, H*dout)
            "w_v": jnp.concatenate(w_v_h, axis=1),                        # (din, H*dout)
            "w_e2v_bd": jax.scipy.linalg.block_diag(*w_e2v_h),            # (H*dout, H*dout)
            "a1b": jax.scipy.linalg.block_diag(*a1_h),                    # (H, H*dout)
            "a2b": jax.scipy.linalg.block_diag(*a2_h),                    # (H, H*dout)
            "lin_wt": lin_wt,                                             # (H*dout, dout)
        })
    return params


# --------------------------- Main ----------------------------------------------
if __name__ == "__main__":
    N, E = 16, 8                      # vertices, hyperedges
    linear_list1 = [16, 32]
    gnn_list = [32, 32]
    linear_list2 = [32, 8]

    key = jax.random.PRNGKey(0)
    key, kx, ka, kp = jax.random.split(key, 4)

    x = jax.random.normal(kx, (N, linear_list1[0]), jnp.float32)
    A = (jax.random.uniform(ka, (N, E)) < 0.5).astype(jnp.float32)
    A = A.at[:, 0].set(1.0)           # every vertex in hyperedge 0 (row sums > 0)
    A = A.at[0, :].set(1.0)           # every hyperedge non-empty (degrees > 0)

    params = init_params(kp, linear_list1, linear_list2, gnn_list, num_heads=4)

    fwd = jax.jit(model_forward)
    out, penalty = fwd(x, A, params)
    out = jax.block_until_ready(out)

    assert out.shape == (N, linear_list2[-1]), out.shape
    assert bool(jnp.all(jnp.isfinite(out)))
    assert penalty == []
    print("KERNEL_OK")
</pallas_src>

<mosaic_0001>
module attributes {stable_mosaic.version = 11 : i64} {
  func.func @_fused_kernel(%arg0: memref<16x16xf32, #tpu.memory_space<vmem>>, %arg1: memref<16x8xf32, #tpu.memory_space<vmem>>, %arg2: memref<8x16xf32, #tpu.memory_space<vmem>>, %arg3: memref<16x32xf32, #tpu.memory_space<vmem>>, %arg4: memref<1x32xf32, #tpu.memory_space<vmem>>, %arg5: memref<32x128xf32, #tpu.memory_space<vmem>>, %arg6: memref<32x128xf32, #tpu.memory_space<vmem>>, %arg7: memref<128x128xf32, #tpu.memory_space<vmem>>, %arg8: memref<4x128xf32, #tpu.memory_space<vmem>>, %arg9: memref<4x128xf32, #tpu.memory_space<vmem>>, %arg10: memref<128x32xf32, #tpu.memory_space<vmem>>, %arg11: memref<32x8xf32, #tpu.memory_space<vmem>>, %arg12: memref<1x8xf32, #tpu.memory_space<vmem>>, %arg13: memref<16x8xf32, #tpu.memory_space<vmem>>) attributes {dimension_semantics = [], scalar_prefetch = 0 : i64, scratch_operands = 0 : i64, tpu.core_type = #tpu.core_type<tc>} {
    %c0 = arith.constant 0 : index
    %c0_0 = arith.constant 0 : index
    %0 = vector.load %arg0[%c0, %c0_0] : memref<16x16xf32, #tpu.memory_space<vmem>>, vector<16x16xf32>
    %c0_1 = arith.constant 0 : index
    %c0_2 = arith.constant 0 : index
    %1 = vector.load %arg1[%c0_1, %c0_2] : memref<16x8xf32, #tpu.memory_space<vmem>>, vector<16x8xf32>
    %c0_3 = arith.constant 0 : index
    %c0_4 = arith.constant 0 : index
    %2 = vector.load %arg2[%c0_3, %c0_4] : memref<8x16xf32, #tpu.memory_space<vmem>>, vector<8x16xf32>
    %cst = arith.constant dense<0.000000e+00> : vector<8xf32>
    %3 = vector.multi_reduction <add>, %2, %cst [1] : vector<8x16xf32> to vector<8xf32>
    %4 = vector.shape_cast %3 : vector<8xf32> to vector<8x1xf32>
    %c0_5 = arith.constant 0 : index
    %c0_6 = arith.constant 0 : index
    %5 = vector.load %arg3[%c0_5, %c0_6] : memref<16x32xf32, #tpu.memory_space<vmem>>, vector<16x32xf32>
    %c0_7 = arith.constant 0 : index
    %c0_8 = arith.constant 0 : index
    %6 = vector.load %arg4[%c0_7, %c0_8] : memref<1x32xf32, #tpu.memory_space<vmem>>, vector<1x32xf32>
    %cst_9 = arith.constant dense<0.000000e+00> : vector<16x32xf32>
    %7 = tpu.matmul %0, %5, %cst_9 {dimension_numbers = #tpu.dot_dimension_numbers<[1], [0], [0], [1], [0, 0, 1, 1], [], []>} : vector<16x16xf32>, vector<16x32xf32>, vector<16x32xf32> -> vector<16x32xf32>
    %8 = vector.broadcast %6 : vector<1x32xf32> to vector<16x32xf32>
    %9 = arith.addf %7, %8 : vector<16x32xf32>
    %cst_10 = arith.constant 0.000000e+00 : f32
    %10 = vector.broadcast %cst_10 : f32 to vector<16x32xf32>
    %11 = arith.cmpf ogt, %9, %10 : vector<16x32xf32>
    %cst_11 = arith.constant 1.000000e-01 : f32
    %12 = vector.broadcast %cst_11 : f32 to vector<16x32xf32>
    %13 = arith.mulf %12, %9 : vector<16x32xf32>
    %14 = arith.select %11, %9, %13 : vector<16x32xi1>, vector<16x32xf32>
    %c0_12 = arith.constant 0 : index
    %c0_13 = arith.constant 0 : index
    %15 = vector.load %arg5[%c0_12, %c0_13] : memref<32x128xf32, #tpu.memory_space<vmem>>, vector<32x128xf32>
    %c0_14 = arith.constant 0 : index
    %c0_15 = arith.constant 0 : index
    %16 = vector.load %arg6[%c0_14, %c0_15] : memref<32x128xf32, #tpu.memory_space<vmem>>, vector<32x128xf32>
    %c0_16 = arith.constant 0 : index
    %c0_17 = arith.constant 0 : index
    %17 = vector.load %arg7[%c0_16, %c0_17] : memref<128x128xf32, #tpu.memory_space<vmem>>, vector<128x128xf32>
    %c0_18 = arith.constant 0 : index
    %c0_19 = arith.constant 0 : index
    %18 = vector.load %arg8[%c0_18, %c0_19] : memref<4x128xf32, #tpu.memory_space<vmem>>, vector<4x128xf32>
    %c0_20 = arith.constant 0 : index
    %c0_21 = arith.constant 0 : index
    %19 = vector.load %arg9[%c0_20, %c0_21] : memref<4x128xf32, #tpu.memory_space<vmem>>, vector<4x128xf32>
    %c0_22 = arith.constant 0 : index
    %c0_23 = arith.constant 0 : index
    %20 = vector.load %arg10[%c0_22, %c0_23] : memref<128x32xf32, #tpu.memory_space<vmem>>, vector<128x32xf32>
    %cst_24 = arith.constant dense<0.000000e+00> : vector<8x32xf32>
    %21 = tpu.matmul %2, %14, %cst_24 {dimension_numbers = #tpu.dot_dimension_numbers<[1], [0], [0], [1], [0, 0, 1, 1], [], []>} : vector<8x16xf32>, vector<16x32xf32>, vector<8x32xf32> -> vector<8x32xf32>
    %cst_25 = arith.constant dense<0.000000e+00> : vector<8x128xf32>
    %22 = tpu.matmul %21, %15, %cst_25 {dimension_numbers = #tpu.dot_dimension_numbers<[1], [0], [0], [1], [0, 0, 1, 1], [], []>} : vector<8x32xf32>, vector<32x128xf32>, vector<8x128xf32> -> vector<8x128xf32>
    %23 = vector.broadcast %4 : vector<8x1xf32> to vector<8x128xf32>
    %24 = arith.divf %22, %23 : vector<8x128xf32>
    %cst_26 = arith.constant dense<0.000000e+00> : vector<8x128xf32>
    %25 = tpu.matmul %24, %17, %cst_26 {dimension_numbers = #tpu.dot_dimension_numbers<[1], [0], [0], [1], [0, 0, 1, 1], [], []>} : vector<8x128xf32>, vector<128x128xf32>, vector<8x128xf32> -> vector<8x128xf32>
    %cst_27 = arith.constant dense<0.000000e+00> : vector<16x128xf32>
    %26 = tpu.matmul %14, %16, %cst_27 {dimension_numbers = #tpu.dot_dimension_numbers<[1], [0], [0], [1], [0, 0, 1, 1], [], []>} : vector<16x32xf32>, vector<32x128xf32>, vector<16x128xf32> -> vector<16x128xf32>
    %cst_28 = arith.constant dense<0.000000e+00> : vector<4x8xf32>
    %27 = tpu.matmul %19, %25, %cst_28 {dimension_numbers = #tpu.dot_dimension_numbers<[1], [1], [0], [0], [0, 0, 1, 0], [], []>} : vector<4x128xf32>, vector<8x128xf32>, vector<4x8xf32> -> vector<4x8xf32>
    %cst_29 = arith.constant dense<0.000000e+00> : vector<16x4xf32>
    %28 = tpu.matmul %26, %18, %cst_29 {dimension_numbers = #tpu.dot_dimension_numbers<[1], [1], [0], [0], [0, 0, 1, 0], [], []>} : vector<16x128xf32>, vector<4x128xf32>, vector<16x4xf32> -> vector<16x4xf32>
    %29 = vector.extract_strided_slice %27 {offsets = [0, 0], sizes = [1, 8], strides = [1, 1]} : vector<4x8xf32> to vector<1x8xf32>
    %30 = vector.extract_strided_slice %28 {offsets = [0, 0], sizes = [16, 1], strides = [1, 1]} : vector<16x4xf32> to vector<16x1xf32>
    %31 = vector.broadcast %29 : vector<1x8xf32> to vector<16x8xf32>
    %32 = vector.broadcast %30 : vector<16x1xf32> to vector<16x8xf32>
    %33 = arith.addf %31, %32 : vector<16x8xf32>
    %cst_30 = arith.constant 8.000000e+00 : f32
    %34 = vector.broadcast %cst_30 : f32 to vector<16x8xf32>
    %35 = arith.divf %33, %34 : vector<16x8xf32>
    %36 = math.tanh %35 : vector<16x8xf32>
    %cst_31 = arith.constant 8.000000e+00 : f32
    %37 = vector.broadcast %cst_31 : f32 to vector<16x8xf32>
    %38 = arith.mulf %36, %37 : vector<16x8xf32>
    %cst_32 = arith.constant 0.000000e+00 : f32
    %39 = vector.broadcast %cst_32 : f32 to vector<16x8xf32>
    %40 = arith.cmpf ogt, %38, %39 : vector<16x8xf32>
    %cst_33 = arith.constant 1.000000e-01 : f32
    %41 = vector.broadcast %cst_33 : f32 to vector<16x8xf32>
    %42 = arith.mulf %41, %38 : vector<16x8xf32>
    %43 = arith.select %40, %38, %42 : vector<16x8xi1>, vector<16x8xf32>
    %44 = math.exp %43 : vector<16x8xf32>
    %45 = arith.mulf %44, %1 : vector<16x8xf32>
    %cst_34 = arith.constant dense<0.000000e+00> : vector<16xf32>
    %46 = vector.multi_reduction <add>, %45, %cst_34 [1] : vector<16x8xf32> to vector<16xf32>
    %47 = vector.shape_cast %46 : vector<16xf32> to vector<16x1xf32>
    %48 = vector.broadcast %47 : vector<16x1xf32> to vector<16x8xf32>
    %49 = arith.divf %45, %48 : vector<16x8xf32>
    %50 = vector.extract_strided_slice %25 {offsets = [0, 0], sizes = [8, 32], strides = [1, 1]} : vector<8x128xf32> to vector<8x32xf32>
    %cst_35 = arith.constant dense<0.000000e+00> : vector<16x32xf32>
    %51 = tpu.matmul %49, %50, %cst_35 {dimension_numbers = #tpu.dot_dimension_numbers<[1], [0], [0], [1], [0, 0, 1, 1], [], []>} : vector<16x8xf32>, vector<8x32xf32>, vector<16x32xf32> -> vector<16x32xf32>
    %cst_36 = arith.constant 0.000000e+00 : f32
    %52 = vector.broadcast %cst_36 : f32 to vector<16x32xf32>
    %53 = arith.cmpf ogt, %51, %52 : vector<16x32xf32>
    %cst_37 = arith.constant 1.000000e-01 : f32
    %54 = vector.broadcast %cst_37 : f32 to vector<16x32xf32>
    %55 = arith.mulf %54, %51 : vector<16x32xf32>
    %56 = arith.select %53, %51, %55 : vector<16x32xi1>, vector<16x32xf32>
    %57 = vector.extract_strided_slice %27 {offsets = [1, 0], sizes = [1, 8], strides = [1, 1]} : vector<4x8xf32> to vector<1x8xf32>
    %58 = vector.extract_strided_slice %28 {offsets = [0, 1], sizes = [16, 1], strides = [1, 1]} : vector<16x4xf32> to vector<16x1xf32>
    %59 = vector.broadcast %57 : vector<1x8xf32> to vector<16x8xf32>
    %60 = vector.broadcast %58 : vector<16x1xf32> to vector<16x8xf32>
    %61 = arith.addf %59, %60 : vector<16x8xf32>
    %cst_38 = arith.constant 8.000000e+00 : f32
    %62 = vector.broadcast %cst_38 : f32 to vector<16x8xf32>
    %63 = arith.divf %61, %62 : vector<16x8xf32>
    %64 = math.tanh %63 : vector<16x8xf32>
    %cst_39 = arith.constant 8.000000e+00 : f32
    %65 = vector.broadcast %cst_39 : f32 to vector<16x8xf32>
    %66 = arith.mulf %64, %65 : vector<16x8xf32>
    %cst_40 = arith.constant 0.000000e+00 : f32
    %67 = vector.broadcast %cst_40 : f32 to vector<16x8xf32>
    %68 = arith.cmpf ogt, %66, %67 : vector<16x8xf32>
    %cst_41 = arith.constant 1.000000e-01 : f32
    %69 = vector.broadcast %cst_41 : f32 to vector<16x8xf32>
    %70 = arith.mulf %69, %66 : vector<16x8xf32>
    %71 = arith.select %68, %66, %70 : vector<16x8xi1>, vector<16x8xf32>
    %72 = math.exp %71 : vector<16x8xf32>
    %73 = arith.mulf %72, %1 : vector<16x8xf32>
    %cst_42 = arith.constant dense<0.000000e+00> : vector<16xf32>
    %74 = vector.multi_reduction <add>, %73, %cst_42 [1] : vector<16x8xf32> to vector<16xf32>
    %75 = vector.shape_cast %74 : vector<16xf32> to vector<16x1xf32>
    %76 = vector.broadcast %75 : vector<16x1xf32> to vector<16x8xf32>
    %77 = arith.divf %73, %76 : vector<16x8xf32>
    %78 = vector.extract_strided_slice %25 {offsets = [0, 32], sizes = [8, 32], strides = [1, 1]} : vector<8x128xf32> to vector<8x32xf32>
    %cst_43 = arith.constant dense<0.000000e+00> : vector<16x32xf32>
    %79 = tpu.matmul %77, %78, %cst_43 {dimension_numbers = #tpu.dot_dimension_numbers<[1], [0], [0], [1], [0, 0, 1, 1], [], []>} : vector<16x8xf32>, vector<8x32xf32>, vector<16x32xf32> -> vector<16x32xf32>
    %cst_44 = arith.constant 0.000000e+00 : f32
    %80 = vector.broadcast %cst_44 : f32 to vector<16x32xf32>
    %81 = arith.cmpf ogt, %79, %80 : vector<16x32xf32>
    %cst_45 = arith.constant 1.000000e-01 : f32
    %82 = vector.broadcast %cst_45 : f32 to vector<16x32xf32>
    %83 = arith.mulf %82, %79 : vector<16x32xf32>
    %84 = arith.select %81, %79, %83 : vector<16x32xi1>, vector<16x32xf32>
    %85 = vector.extract_strided_slice %27 {offsets = [2, 0], sizes = [1, 8], strides = [1, 1]} : vector<4x8xf32> to vector<1x8xf32>
    %86 = vector.extract_strided_slice %28 {offsets = [0, 2], sizes = [16, 1], strides = [1, 1]} : vector<16x4xf32> to vector<16x1xf32>
    %87 = vector.broadcast %85 : vector<1x8xf32> to vector<16x8xf32>
    %88 = vector.broadcast %86 : vector<16x1xf32> to vector<16x8xf32>
    %89 = arith.addf %87, %88 : vector<16x8xf32>
    %cst_46 = arith.constant 8.000000e+00 : f32
    %90 = vector.broadcast %cst_46 : f32 to vector<16x8xf32>
    %91 = arith.divf %89, %90 : vector<16x8xf32>
    %92 = math.tanh %91 : vector<16x8xf32>
    %cst_47 = arith.constant 8.000000e+00 : f32
    %93 = vector.broadcast %cst_47 : f32 to vector<16x8xf32>
    %94 = arith.mulf %92, %93 : vector<16x8xf32>
    %cst_48 = arith.constant 0.000000e+00 : f32
    %95 = vector.broadcast %cst_48 : f32 to vector<16x8xf32>
    %96 = arith.cmpf ogt, %94, %95 : vector<16x8xf32>
    %cst_49 = arith.constant 1.000000e-01 : f32
    %97 = vector.broadcast %cst_49 : f32 to vector<16x8xf32>
    %98 = arith.mulf %97, %94 : vector<16x8xf32>
    %99 = arith.select %96, %94, %98 : vector<16x8xi1>, vector<16x8xf32>
    %100 = math.exp %99 : vector<16x8xf32>
    %101 = arith.mulf %100, %1 : vector<16x8xf32>
    %cst_50 = arith.constant dense<0.000000e+00> : vector<16xf32>
    %102 = vector.multi_reduction <add>, %101, %cst_50 [1] : vector<16x8xf32> to vector<16xf32>
    %103 = vector.shape_cast %102 : vector<16xf32> to vector<16x1xf32>
    %104 = vector.broadcast %103 : vector<16x1xf32> to vector<16x8xf32>
    %105 = arith.divf %101, %104 : vector<16x8xf32>
    %106 = vector.extract_strided_slice %25 {offsets = [0, 64], sizes = [8, 32], strides = [1, 1]} : vector<8x128xf32> to vector<8x32xf32>
    %cst_51 = arith.constant dense<0.000000e+00> : vector<16x32xf32>
    %107 = tpu.matmul %105, %106, %cst_51 {dimension_numbers = #tpu.dot_dimension_numbers<[1], [0], [0], [1], [0, 0, 1, 1], [], []>} : vector<16x8xf32>, vector<8x32xf32>, vector<16x32xf32> -> vector<16x32xf32>
    %cst_52 = arith.constant 0.000000e+00 : f32
    %108 = vector.broadcast %cst_52 : f32 to vector<16x32xf32>
    %109 = arith.cmpf ogt, %107, %108 : vector<16x32xf32>
    %cst_53 = arith.constant 1.000000e-01 : f32
    %110 = vector.broadcast %cst_53 : f32 to vector<16x32xf32>
    %111 = arith.mulf %110, %107 : vector<16x32xf32>
    %112 = arith.select %109, %107, %111 : vector<16x32xi1>, vector<16x32xf32>
    %113 = vector.extract_strided_slice %27 {offsets = [3, 0], sizes = [1, 8], strides = [1, 1]} : vector<4x8xf32> to vector<1x8xf32>
    %114 = vector.extract_strided_slice %28 {offsets = [0, 3], sizes = [16, 1], strides = [1, 1]} : vector<16x4xf32> to vector<16x1xf32>
    %115 = vector.broadcast %113 : vector<1x8xf32> to vector<16x8xf32>
    %116 = vector.broadcast %114 : vector<16x1xf32> to vector<16x8xf32>
    %117 = arith.addf %115, %116 : vector<16x8xf32>
    %cst_54 = arith.constant 8.000000e+00 : f32
    %118 = vector.broadcast %cst_54 : f32 to vector<16x8xf32>
    %119 = arith.divf %117, %118 : vector<16x8xf32>
    %120 = math.tanh %119 : vector<16x8xf32>
    %cst_55 = arith.constant 8.000000e+00 : f32
    %121 = vector.broadcast %cst_55 : f32 to vector<16x8xf32>
    %122 = arith.mulf %120, %121 : vector<16x8xf32>
    %cst_56 = arith.constant 0.000000e+00 : f32
    %123 = vector.broadcast %cst_56 : f32 to vector<16x8xf32>
    %124 = arith.cmpf ogt, %122, %123 : vector<16x8xf32>
    %cst_57 = arith.constant 1.000000e-01 : f32
    %125 = vector.broadcast %cst_57 : f32 to vector<16x8xf32>
    %126 = arith.mulf %125, %122 : vector<16x8xf32>
    %127 = arith.select %124, %122, %126 : vector<16x8xi1>, vector<16x8xf32>
    %128 = math.exp %127 : vector<16x8xf32>
    %129 = arith.mulf %128, %1 : vector<16x8xf32>
    %cst_58 = arith.constant dense<0.000000e+00> : vector<16xf32>
    %130 = vector.multi_reduction <add>, %129, %cst_58 [1] : vector<16x8xf32> to vector<16xf32>
    %131 = vector.shape_cast %130 : vector<16xf32> to vector<16x1xf32>
    %132 = vector.broadcast %131 : vector<16x1xf32> to vector<16x8xf32>
    %133 = arith.divf %129, %132 : vector<16x8xf32>
    %134 = vector.extract_strided_slice %25 {offsets = [0, 96], sizes = [8, 32], strides = [1, 1]} : vector<8x128xf32> to vector<8x32xf32>
    %cst_59 = arith.constant dense<0.000000e+00> : vector<16x32xf32>
    %135 = tpu.matmul %133, %134, %cst_59 {dimension_numbers = #tpu.dot_dimension_numbers<[1], [0], [0], [1], [0, 0, 1, 1], [], []>} : vector<16x8xf32>, vector<8x32xf32>, vector<16x32xf32> -> vector<16x32xf32>
    %cst_60 = arith.constant 0.000000e+00 : f32
    %136 = vector.broadcast %cst_60 : f32 to vector<16x32xf32>
    %137 = arith.cmpf ogt, %135, %136 : vector<16x32xf32>
    %cst_61 = arith.constant 1.000000e-01 : f32
    %138 = vector.broadcast %cst_61 : f32 to vector<16x32xf32>
    %139 = arith.mulf %138, %135 : vector<16x32xf32>
    %140 = arith.select %137, %135, %139 : vector<16x32xi1>, vector<16x32xf32>
    %141 = tpu.concatenate %56, %84, %112, %140 in 1 : vector<16x32xf32>, vector<16x32xf32>, vector<16x32xf32>, vector<16x32xf32> -> vector<16x128xf32>
    %cst_62 = arith.constant dense<0.000000e+00> : vector<16x32xf32>
    %142 = tpu.matmul %141, %20, %cst_62 {dimension_numbers = #tpu.dot_dimension_numbers<[1], [0], [0], [1], [0, 0, 1, 1], [], []>} : vector<16x128xf32>, vector<128x32xf32>, vector<16x32xf32> -> vector<16x32xf32>
    %cst_63 = arith.constant 0.000000e+00 : f32
    %143 = vector.broadcast %cst_63 : f32 to vector<16x32xf32>
    %144 = arith.cmpf ogt, %142, %143 : vector<16x32xf32>
    %cst_64 = arith.constant 1.000000e-01 : f32
    %145 = vector.broadcast %cst_64 : f32 to vector<16x32xf32>
    %146 = arith.mulf %145, %142 : vector<16x32xf32>
    %147 = arith.select %144, %142, %146 : vector<16x32xi1>, vector<16x32xf32>
    %c0_65 = arith.constant 0 : index
    %c0_66 = arith.constant 0 : index
    %148 = vector.load %arg11[%c0_65, %c0_66] : memref<32x8xf32, #tpu.memory_space<vmem>>, vector<32x8xf32>
    %c0_67 = arith.constant 0 : index
    %c0_68 = arith.constant 0 : index
    %149 = vector.load %arg12[%c0_67, %c0_68] : memref<1x8xf32, #tpu.memory_space<vmem>>, vector<1x8xf32>
    %cst_69 = arith.constant dense<0.000000e+00> : vector<16x8xf32>
    %150 = tpu.matmul %147, %148, %cst_69 {dimension_numbers = #tpu.dot_dimension_numbers<[1], [0], [0], [1], [0, 0, 1, 1], [], []>} : vector<16x32xf32>, vector<32x8xf32>, vector<16x8xf32> -> vector<16x8xf32>
    %151 = vector.broadcast %149 : vector<1x8xf32> to vector<16x8xf32>
    %152 = arith.addf %150, %151 : vector<16x8xf32>
    %c0_70 = arith.constant 0 : index
    %c0_71 = arith.constant 0 : index
    %153 = vector.load %arg13[%c0_70, %c0_71] : memref<16x8xf32, #tpu.memory_space<vmem>>, vector<16x8xf32>
    tpu.vector_store %arg13[%c0_70, %c0_71], %152 {strides = array<i32>} : memref<16x8xf32, #tpu.memory_space<vmem>>, vector<16x8xf32>,
    return
  }
}

</mosaic_0001>

<llo_original>
// kernel: model_forward.1
$region0: #{model_forward.1}
  #allocation0 [shape = 'u32[]', space=smem, size = 0x4, offset = 0x4, fixed_abs, tag = 'smem constant byte address 0x4 - core index']
  #allocation1 [shape = 'u32[144,128]{1,0:T(1,128)}', space=vmem, size = 0x12000, scoped, tag = 'internal scratch']
  %s0 = inlined_call_operand.vmem [shape: f32[16,16], index: 0, kind: input, shape index: {}]
  %s1 = inlined_call_operand.vmem [shape: f32[16,8], index: 1, kind: input, shape index: {}]
  %s2 = inlined_call_operand.vmem [shape: f32[8,16], index: 2, kind: input, shape index: {}]
  %s3 = inlined_call_operand.vmem [shape: f32[16,32], index: 3, kind: input, shape index: {}]
  %s4 = inlined_call_operand.vmem [shape: f32[1,32], index: 4, kind: input, shape index: {}]
  %s5 = inlined_call_operand.vmem [shape: f32[32,128], index: 5, kind: input, shape index: {}]
  %s6 = inlined_call_operand.vmem [shape: f32[32,128], index: 6, kind: input, shape index: {}]
  %s7 = inlined_call_operand.vmem [shape: f32[128,128], index: 7, kind: input, shape index: {}]
  %s8 = inlined_call_operand.vmem [shape: f32[4,128], index: 8, kind: input, shape index: {}]
  %s9 = inlined_call_operand.hbm [shape: f32[4,128], index: 9, kind: input, shape index: {}]
  %s10 = inlined_call_operand.vmem [shape: f32[128,32], index: 10, kind: input, shape index: {}]
  %s11 = inlined_call_operand.vmem [shape: f32[32,8], index: 11, kind: input, shape index: {}]
  %s12 = inlined_call_operand.vmem [shape: f32[1,8], index: 12, kind: input, shape index: {}]
  %s13 = inlined_call_operand.vmem [shape: f32[16,8], index: 13, kind: output, shape index: {}]
  %s14 = sld [smem:[#allocation0]]
  $region66: #{model_forward.1} parent=0
    _
  %s16 = ssub.s32 1, %s14
  %s17 = scalar_select 0, %s16, %s14
  $region1: #{model_forward.1} parent=0
    #allocation2 [shape = 'u8[2048]{0}', space=vmem, size = 0x800, scoped, tag = 'input window, operand 9, single buffered']
    #allocation3 [shape = 's32[1]{0}', space=sflag, size = 0x4, scoped, tag = 'scoped memory for model_forward.1']
    %18 = vsyncpa [#allocation3], 0
    // Predicated region
    $region2: #{model_forward.1} parent=1 // pred_check
      _
    $region3: #{model_forward.1} parent=1 // pred_check_branch
      %20 = sbr.rel (0) target = $region5
    $region4: #{model_forward.1} parent=1 // pred_region
      _
    $region5: #{model_forward.1} parent=1 // pred_fallthru
      _
    // Predicated region
    $region6: #{model_forward.1} parent=1 // pred_check
      _
    $region7: #{model_forward.1} parent=1 // pred_check_branch
      %22 = sbr.rel (0) target = $region9
    $region8: #{model_forward.1} parent=1 // pred_region
      _
    $region9: #{model_forward.1} parent=1 // pred_fallthru
      _
    // Predicated region
    $region10: #{model_forward.1} parent=1 // pred_check
      _
    $region11: #{model_forward.1} parent=1 // pred_check_branch
      %24 = sbr.rel (0) target = $region13
    $region12: #{model_forward.1} parent=1 // pred_region
      _
    $region13: #{model_forward.1} parent=1 // pred_fallthru
      _
    // Predicated region
    $region14: #{model_forward.1} parent=1 // pred_check
      _
    $region15: #{model_forward.1} parent=1 // pred_check_branch
      %26 = sbr.rel (0) target = $region17
    $region16: #{model_forward.1} parent=1 // pred_region
      _
    $region17: #{model_forward.1} parent=1 // pred_fallthru
      _
    // Predicated region
    $region18: #{model_forward.1} parent=1 // pred_check
      _
    $region19: #{model_forward.1} parent=1 // pred_check_branch
      %28 = sbr.rel (0) target = $region21
    $region20: #{model_forward.1} parent=1 // pred_region
      _
    $region21: #{model_forward.1} parent=1 // pred_fallthru
      _
    // Predicated region
    $region22: #{model_forward.1} parent=1 // pred_check
      _
    $region23: #{model_forward.1} parent=1 // pred_check_branch
      %30 = sbr.rel (0) target = $region25
    $region24: #{model_forward.1} parent=1 // pred_region
      _
    $region25: #{model_forward.1} parent=1 // pred_fallthru
      _
    // Predicated region
    $region26: #{model_forward.1} parent=1 // pred_check
      _
    $region27: #{model_forward.1} parent=1 // pred_check_branch
      %32 = sbr.rel (0) target = $region29
    $region28: #{model_forward.1} parent=1 // pred_region
      _
    $region29: #{model_forward.1} parent=1 // pred_fallthru
      _
    // Predicated region
    $region30: #{model_forward.1} parent=1 // pred_check
      _
    $region31: #{model_forward.1} parent=1 // pred_check_branch
      %34 = sbr.rel (0) target = $region33
    $region32: #{model_forward.1} parent=1 // pred_region
      _
    $region33: #{model_forward.1} parent=1 // pred_fallthru
      _
    // Predicated region
    $region34: #{model_forward.1} parent=1 // pred_check
      _
    $region35: #{model_forward.1} parent=1 // pred_check_branch
      %36 = sbr.rel (0) target = $region37
    $region36: #{model_forward.1} parent=1 // pred_region
      _
    $region37: #{model_forward.1} parent=1 // pred_fallthru
      _
    // Predicated region
    $region38: #{model_forward.1} parent=1 // pred_check
      _
    $region39: #{model_forward.1} parent=1 // pred_check_branch
      %38 = sbr.rel (0) target = $region41
    $region40: #{model_forward.1} parent=1 // pred_region
      %s40 = ssub.s32 64, 64
      %41 = vsyncadd [#allocation3], %s40
      %s43 = sshll.u32 [#allocation2], 4
      %s44 = int_to_ptr.vmem [resolvable:$true] %s43
      %46 = dma.hbm_to_vmem [thread:$0]  %s9, 64, %s44, [#allocation3]
    $region41: #{model_forward.1} parent=1 // pred_fallthru
      _
    // Predicated region
    $region42: #{model_forward.1} parent=1 // pred_check
      _
    $region43: #{model_forward.1} parent=1 // pred_check_branch
      %48 = sbr.rel (0) target = $region45
    $region44: #{model_forward.1} parent=1 // pred_region
      _
    $region45: #{model_forward.1} parent=1 // pred_fallthru
      _
    // Predicated region
    $region46: #{model_forward.1} parent=1 // pred_check
      _
    $region47: #{model_forward.1} parent=1 // pred_check_branch
      %50 = sbr.rel (0) target = $region49
    $region48: #{model_forward.1} parent=1 // pred_region
      _
    $region49: #{model_forward.1} parent=1 // pred_fallthru
      _
    // Predicated region
    $region50: #{model_forward.1} parent=1 // pred_check
      _
    $region51: #{model_forward.1} parent=1 // pred_check_branch
      %52 = sbr.rel (0) target = $region53
    $region52: #{model_forward.1} parent=1 // pred_region
      _
    $region53: #{model_forward.1} parent=1 // pred_fallthru
      _
    // Predicated region
    $region54: #{model_forward.1} parent=1 // pred_check
      _
    $region55: #{model_forward.1} parent=1 // pred_check_branch
      %54 = sbr.rel (0) target = $region57
    $region56: #{model_forward.1} parent=1 // pred_region
      %55 = dma.done [#allocation3], 64
    $region57: #{model_forward.1} parent=1 // pred_fallthru
      _
    %v56 = vld [vmem:[%s0] sm:$0xff]
    %v57 = vld [vmem:[%s0 + $0x8] sm:$0xff]
    %v58 = vld [vmem:[%s1] sm:$0xff]
    %v59 = vld [vmem:[%s1 + $0x8] sm:$0xff]
    %v60 = vld [vmem:[%s2] sm:$0xff]
    %vm61 = vcmask 130048
    %v62 = vsel %vm61, %v60, 0.0
    %63 = vadd.xlane.f32.xlu0 %v62
    %v64 = vpop.xlane.xlu0 %63
    %v65 = vld [vmem:[%s3] sm:$0xff]
    %v66 = vld [vmem:[%s3 + $0x8] sm:$0xff]
    %v67 = vld [vmem:[%s4] sm:$0x1]
    %v69 = vlaneseq
    %v70 = vshrl.u32 %v69, 7
    %v71 = vsub.s32 0, %v70
    %v72 = vrot.slane %v67, %v71
    %v75 = vsel %vm61, %v56, 0
    %v78 = vsel %vm61, %v57, 0
    %80 = vmatprep.subr.mxu0 0.0
    %81 = vmatpush1.msra.mxu0 %v65
    %82 = vmatprep.subr.mxu0 0.0
    %83 = vmatpush1.msra.mxu0 %v66
    %84 = vmatprep.subr.mxu0 0.0
    %85 = vmatpush1.msra.mxu0 0.0
    %86 = vmatprep.subr.mxu0 0.0
    %87 = vmatpush1.msra.mxu0 0.0
    %88 = vmatprep.subr.mxu0 0.0
    %89 = vmatpush1.msra.mxu0 0.0
    %90 = vmatprep.subr.mxu0 0.0
    %91 = vmatpush1.msra.mxu0 0.0
    %92 = vmatprep.subr.mxu0 0.0
    %93 = vmatpush1.msra.mxu0 0.0
    %94 = vmatprep.subr.mxu0 0.0
    %95 = vmatpush1.msra.mxu0 0.0
    %96 = vmatprep.subr.mxu0 0.0
    %97 = vmatpush1.msra.mxu0 0.0
    %98 = vmatprep.subr.mxu0 0.0
    %99 = vmatpush1.msra.mxu0 0.0
    %100 = vmatprep.subr.mxu0 0.0
    %101 = vmatpush1.msra.mxu0 0.0
    %102 = vmatprep.subr.mxu0 0.0
    %103 = vmatpush1.msra.mxu0 0.0
    %104 = vmatprep.subr.mxu0 0.0
    %105 = vmatpush1.msra.mxu0 0.0
    %106 = vmatprep.subr.mxu0 0.0
    %107 = vmatpush1.msra.mxu0 0.0
    %108 = vmatprep.subr.mxu0 0.0
    %109 = vmatpush1.msra.mxu0 0.0
    %110 = vmatprep.subr.mxu0 0.0
    %111 = vmatpush1.msra.mxu0 0.0
    %112 = vmatprep.subr.mxu0 0.0
    %113 = vmatpush1.msra.mxu0 0.0
    %114 = vmatprep.subr.mxu0 0.0
    %115 = vmatpush1.msra.mxu0 0.0
    %116 = vmatprep.subr.mxu0 0.0
    %117 = vmatpush1.msra.mxu0 0.0
    %118 = vmatprep.subr.mxu0 0.0
    %119 = vmatpush1.msra.mxu0 0.0
    %120 = vmatprep.subr.mxu0 0.0
    %121 = vmatpush1.msra.mxu0 0.0
    %122 = vmatprep.subr.mxu0 0.0
    %123 = vmatpush1.msra.mxu0 0.0
    %124 = vmatprep.subr.mxu0 0.0
    %125 = vmatpush1.msra.mxu0 0.0
    %126 = vmatprep.subr.mxu0 0.0
    %127 = vmatpush1.msra.mxu0 0.0
    %128 = vmatprep.subr.mxu0 0.0
    %129 = vmatpush1.msra.mxu0 0.0
    %130 = vmatprep.subr.mxu0 0.0
    %131 = vmatpush1.msra.mxu0 0.0
    %132 = vmatprep.subr.mxu0 0.0
    %133 = vmatpush1.msra.mxu0 0.0
    %134 = vmatprep.subr.mxu0 0.0
    %135 = vmatpush1.msra.mxu0 0.0
    %136 = vmatprep.subr.mxu0 0.0
    %137 = vmatpush1.msra.mxu0 0.0
    %138 = vmatprep.subr.mxu0 0.0
    %139 = vmatpush1.msra.mxu0 0.0
    %140 = vmatprep.subr.mxu0 0.0
    %141 = vmatpush1.msra.mxu0 0.0
    %142 = vmatprep.subr.mxu0 0.0
    %143 = vmatpush1.msra.mxu0 0.0
    %144 = vmatprep.mubr.f32.mxu0 0.0
    %145 = vmatmul.mubr.f32.gmra.mrb[0].mxu0 %v75
    %v146 = vpop.f32.mrb[0].mxu0
    %v147 = vadd.f32 %v72, %v146
    %v148 = vpop.f32.mrb[0].mxu0
    %149 = vmatprep.mubr.f32.mxu0 0.0
    %150 = vmatmul.mubr.f32.gmra.mrb[0].mxu0 %v78
    %v151 = vpop.f32.mrb[0].mxu0
    %v152 = vadd.f32 %v72, %v151
    %v153 = vpop.f32.mrb[0].mxu0
    %154 = vdwg.mxu0
    %vm155 = vcmp.gt.f32.partialorder %v147, 0.0
    %vm156 = vcmp.gt.f32.partialorder %v152, 0.0
    %v157 = vmul.f32 %v147, 0.1
    %v158 = vmul.f32 %v152, 0.1
    %v159 = vsel %vm155, %v147, %v157
    %v160 = vsel %vm156, %v152, %v158
    %v161 = vld [vmem:[%s5] sm:$0xff]
    %v162 = vld [vmem:[%s5 + $0x8] sm:$0xff]
    %v163 = vld [vmem:[%s5 + $0x10] sm:$0xff]
    %v164 = vld [vmem:[%s5 + $0x18] sm:$0xff]
    %v165 = vld [vmem:[%s6] sm:$0xff]
    %v166 = vld [vmem:[%s6 + $0x8] sm:$0xff]
    %v167 = vld [vmem:[%s6 + $0x10] sm:$0xff]
    %v168 = vld [vmem:[%s6 + $0x18] sm:$0xff]
    %v169 = vld [vmem:[%s7] sm:$0xff]
    %v170 = vld [vmem:[%s7 + $0x8] sm:$0xff]
    %v171 = vld [vmem:[%s7 + $0x10] sm:$0xff]
    %v172 = vld [vmem:[%s7 + $0x18] sm:$0xff]
    %v173 = vld [vmem:[%s7 + $0x20] sm:$0xff]
    %v174 = vld [vmem:[%s7 + $0x28] sm:$0xff]
    %v175 = vld [vmem:[%s7 + $0x30] sm:$0xff]
    %v176 = vld [vmem:[%s7 + $0x38] sm:$0xff]
    %v177 = vld [vmem:[%s7 + $0x40] sm:$0xff]
    %v178 = vld [vmem:[%s7 + $0x48] sm:$0xff]
    %v179 = vld [vmem:[%s7 + $0x50] sm:$0xff]
    %v180 = vld [vmem:[%s7 + $0x58] sm:$0xff]
    %v181 = vld [vmem:[%s7 + $0x60] sm:$0xff]
    %v182 = vld [vmem:[%s7 + $0x68] sm:$0xff]
    %v183 = vld [vmem:[%s7 + $0x70] sm:$0xff]
    %v184 = vld [vmem:[%s7 + $0x78] sm:$0xff]
    %v185 = vld [vmem:[%s8] sm:$0xf]
    %v186 = vld [vmem:[#allocation2] sm:$0xf]
    %v187 = vld [vmem:[%s10] sm:$0xff]
    %v188 = vld [vmem:[%s10 + $0x8] sm:$0xff]
    %v189 = vld [vmem:[%s10 + $0x10] sm:$0xff]
    %v190 = vld [vmem:[%s10 + $0x18] sm:$0xff]
    %v191 = vld [vmem:[%s10 + $0x20] sm:$0xff]
    %v192 = vld [vmem:[%s10 + $0x28] sm:$0xff]
    %v193 = vld [vmem:[%s10 + $0x30] sm:$0xff]
    %v194 = vld [vmem:[%s10 + $0x38] sm:$0xff]
    %v195 = vld [vmem:[%s10 + $0x40] sm:$0xff]
    %v196 = vld [vmem:[%s10 + $0x48] sm:$0xff]
    %v197 = vld [vmem:[%s10 + $0x50] sm:$0xff]
    %v198 = vld [vmem:[%s10 + $0x58] sm:$0xff]
    %v199 = vld [vmem:[%s10 + $0x60] sm:$0xff]
    %v200 = vld [vmem:[%s10 + $0x68] sm:$0xff]
    %v201 = vld [vmem:[%s10 + $0x70] sm:$0xff]
    %v202 = vld [vmem:[%s10 + $0x78] sm:$0xff]
    %v204 = vsel %vm61, %v60, 0
    %206 = vmatprep.subr.mxu0 0.0
    %207 = vmatpush1.msra.mxu0 %v159
    %208 = vmatprep.subr.mxu0 0.0
    %209 = vmatpush1.msra.mxu0 %v160
    %210 = vmatprep.subr.mxu0 0.0
    %211 = vmatpush1.msra.mxu0 0.0
    %212 = vmatprep.subr.mxu0 0.0
    %213 = vmatpush1.msra.mxu0 0.0
    %214 = vmatprep.subr.mxu0 0.0
    %215 = vmatpush1.msra.mxu0 0.0
    %216 = vmatprep.subr.mxu0 0.0
    %217 = vmatpush1.msra.mxu0 0.0
    %218 = vmatprep.subr.mxu0 0.0
    %219 = vmatpush1.msra.mxu0 0.0
    %220 = vmatprep.subr.mxu0 0.0
    %221 = vmatpush1.msra.mxu0 0.0
    %222 = vmatprep.subr.mxu0 0.0
    %223 = vmatpush1.msra.mxu0 0.0
    %224 = vmatprep.subr.mxu0 0.0
    %225 = vmatpush1.msra.mxu0 0.0
    %226 = vmatprep.subr.mxu0 0.0
    %227 = vmatpush1.msra.mxu0 0.0
    %228 = vmatprep.subr.mxu0 0.0
    %229 = vmatpush1.msra.mxu0 0.0
    %230 = vmatprep.subr.mxu0 0.0
    %231 = vmatpush1.msra.mxu0 0.0
    %232 = vmatprep.subr.mxu0 0.0
    %233 = vmatpush1.msra.mxu0 0.0
    %234 = vmatprep.subr.mxu0 0.0
    %235 = vmatpush1.msra.mxu0 0.0
    %236 = vmatprep.subr.mxu0 0.0
    %237 = vmatpush1.msra.mxu0 0.0
    %238 = vmatprep.subr.mxu0 0.0
    %239 = vmatpush1.msra.mxu0 0.0
    %240 = vmatprep.subr.mxu0 0.0
    %241 = vmatpush1.msra.mxu0 0.0
    %242 = vmatprep.subr.mxu0 0.0
    %243 = vmatpush1.msra.mxu0 0.0
    %244 = vmatprep.subr.mxu0 0.0
    %245 = vmatpush1.msra.mxu0 0.0
    %246 = vmatprep.subr.mxu0 0.0
    %247 = vmatpush1.msra.mxu0 0.0
    %248 = vmatprep.subr.mxu0 0.0
    %249 = vmatpush1.msra.mxu0 0.0
    %250 = vmatprep.subr.mxu0 0.0
    %251 = vmatpush1.msra.mxu0 0.0
    %252 = vmatprep.subr.mxu0 0.0
    %253 = vmatpush1.msra.mxu0 0.0
    %254 = vmatprep.subr.mxu0 0.0
    %255 = vmatpush1.msra.mxu0 0.0
    %256 = vmatprep.subr.mxu0 0.0
    %257 = vmatpush1.msra.mxu0 0.0
    %258 = vmatprep.subr.mxu0 0.0
    %259 = vmatpush1.msra.mxu0 0.0
    %260 = vmatprep.subr.mxu0 0.0
    %261 = vmatpush1.msra.mxu0 0.0
    %262 = vmatprep.subr.mxu0 0.0
    %263 = vmatpush1.msra.mxu0 0.0
    %264 = vmatprep.subr.mxu0 0.0
    %265 = vmatpush1.msra.mxu0 0.0
    %266 = vmatprep.subr.mxu0 0.0
    %267 = vmatpush1.msra.mxu0 0.0
    %268 = vmatprep.subr.mxu0 0.0
    %269 = vmatpush1.msra.mxu0 0.0
    %270 = vmatprep.mubr.f32.mxu0 0.0
    %271 = vmatmul.mubr.f32.gmra.mrb[0].mxu0 %v204
    %v272 = vpop.f32.mrb[0].mxu0
    %v273 = vadd.f32 0.0, %v272
    %v274 = vpop.f32.mrb[0].mxu0
    %275 = vdwg.mxu0
    %vm276 = vcmask 261120
    %v278 = vsel %vm276, %v273, 0
    %280 = vmatprep.subr.mxu0 0.0
    %281 = vmatpush1.msra.mxu0 %v161
    %282 = vmatprep.subr.mxu0 0.0
    %283 = vmatpush1.msra.mxu0 %v162
    %284 = vmatprep.subr.mxu0 0.0
    %285 = vmatpush1.msra.mxu0 %v163
    %286 = vmatprep.subr.mxu0 0.0
    %287 = vmatpush1.msra.mxu0 %v164
    %288 = vmatprep.subr.mxu0 0.0
    %289 = vmatpush1.msra.mxu0 0.0
    %290 = vmatprep.subr.mxu0 0.0
    %291 = vmatpush1.msra.mxu0 0.0
    %292 = vmatprep.subr.mxu0 0.0
    %293 = vmatpush1.msra.mxu0 0.0
    %294 = vmatprep.subr.mxu0 0.0
    %295 = vmatpush1.msra.mxu0 0.0
    %296 = vmatprep.subr.mxu0 0.0
    %297 = vmatpush1.msra.mxu0 0.0
    %298 = vmatprep.subr.mxu0 0.0
    %299 = vmatpush1.msra.mxu0 0.0
    %300 = vmatprep.subr.mxu0 0.0
    %301 = vmatpush1.msra.mxu0 0.0
    %302 = vmatprep.subr.mxu0 0.0
    %303 = vmatpush1.msra.mxu0 0.0
    %304 = vmatprep.subr.mxu0 0.0
    %305 = vmatpush1.msra.mxu0 0.0
    %306 = vmatprep.subr.mxu0 0.0
    %307 = vmatpush1.msra.mxu0 0.0
    %308 = vmatprep.subr.mxu0 0.0
    %309 = vmatpush1.msra.mxu0 0.0
    %310 = vmatprep.subr.mxu0 0.0
    %311 = vmatpush1.msra.mxu0 0.0
    %312 = vmatprep.subr.mxu0 0.0
    %313 = vmatpush1.msra.mxu0 0.0
    %314 = vmatprep.subr.mxu0 0.0
    %315 = vmatpush1.msra.mxu0 0.0
    %316 = vmatprep.subr.mxu0 0.0
    %317 = vmatpush1.msra.mxu0 0.0
    %318 = vmatprep.subr.mxu0 0.0
    %319 = vmatpush1.msra.mxu0 0.0
    %320 = vmatprep.subr.mxu0 0.0
    %321 = vmatpush1.msra.mxu0 0.0
    %322 = vmatprep.subr.mxu0 0.0
    %323 = vmatpush1.msra.mxu0 0.0
    %324 = vmatprep.subr.mxu0 0.0
    %325 = vmatpush1.msra.mxu0 0.0
    %326 = vmatprep.subr.mxu0 0.0
    %327 = vmatpush1.msra.mxu0 0.0
    %328 = vmatprep.subr.mxu0 0.0
    %329 = vmatpush1.msra.mxu0 0.0
    %330 = vmatprep.subr.mxu0 0.0
    %331 = vmatpush1.msra.mxu0 0.0
    %332 = vmatprep.subr.mxu0 0.0
    %333 = vmatpush1.msra.mxu0 0.0
    %334 = vmatprep.subr.mxu0 0.0
    %335 = vmatpush1.msra.mxu0 0.0
    %336 = vmatprep.subr.mxu0 0.0
    %337 = vmatpush1.msra.mxu0 0.0
    %338 = vmatprep.subr.mxu0 0.0
    %339 = vmatpush1.msra.mxu0 0.0
    %340 = vmatprep.subr.mxu0 0.0
    %341 = vmatpush1.msra.mxu0 0.0
    %342 = vmatprep.subr.mxu0 0.0
    %343 = vmatpush1.msra.mxu0 0.0
    %344 = vmatprep.mubr.f32.mxu0 0.0
    %345 = vmatmul.mubr.f32.gmra.mrb[0].mxu0 %v278
    %v346 = vpop.f32.mrb[0].mxu0
    %v347 = vadd.f32 0.0, %v346
    %v348 = vpop.f32.mrb[0].mxu0
    %349 = vdwg.mxu0
    %v350 = vrcp.pop %v64
    %v351 = vmul.f32 %v347, %v350
    %352 = vmatprep.subr.mxu0 0.0
    %353 = vmatpush1.msra.mxu0 %v169
    %354 = vmatprep.subr.mxu0 0.0
    %355 = vmatpush1.msra.mxu0 %v170
    %356 = vmatprep.subr.mxu0 0.0
    %357 = vmatpush1.msra.mxu0 %v171
    %358 = vmatprep.subr.mxu0 0.0
    %359 = vmatpush1.msra.mxu0 %v172
    %360 = vmatprep.subr.mxu0 0.0
    %361 = vmatpush1.msra.mxu0 %v173
    %362 = vmatprep.subr.mxu0 0.0
    %363 = vmatpush1.msra.mxu0 %v174
    %364 = vmatprep.subr.mxu0 0.0
    %365 = vmatpush1.msra.mxu0 %v175
    %366 = vmatprep.subr.mxu0 0.0
    %367 = vmatpush1.msra.mxu0 %v176
    %368 = vmatprep.subr.mxu0 0.0
    %369 = vmatpush1.msra.mxu0 %v177
    %370 = vmatprep.subr.mxu0 0.0
    %371 = vmatpush1.msra.mxu0 %v178
    %372 = vmatprep.subr.mxu0 0.0
    %373 = vmatpush1.msra.mxu0 %v179
    %374 = vmatprep.subr.mxu0 0.0
    %375 = vmatpush1.msra.mxu0 %v180
    %376 = vmatprep.subr.mxu0 0.0
    %377 = vmatpush1.msra.mxu0 %v181
    %378 = vmatprep.subr.mxu0 0.0
    %379 = vmatpush1.msra.mxu0 %v182
    %380 = vmatprep.subr.mxu0 0.0
    %381 = vmatpush1.msra.mxu0 %v183
    %382 = vmatprep.subr.mxu0 0.0
    %383 = vmatpush1.msra.mxu0 %v184
    %384 = vmatprep.subr.mxu0 0.0
    %385 = vmatpush1.msra.mxu0 0.0
    %386 = vmatprep.subr.mxu0 0.0
    %387 = vmatpush1.msra.mxu0 0.0
    %388 = vmatprep.subr.mxu0 0.0
    %389 = vmatpush1.msra.mxu0 0.0
    %390 = vmatprep.subr.mxu0 0.0
    %391 = vmatpush1.msra.mxu0 0.0
    %392 = vmatprep.subr.mxu0 0.0
    %393 = vmatpush1.msra.mxu0 0.0
    %394 = vmatprep.subr.mxu0 0.0
    %395 = vmatpush1.msra.mxu0 0.0
    %396 = vmatprep.subr.mxu0 0.0
    %397 = vmatpush1.msra.mxu0 0.0
    %398 = vmatprep.subr.mxu0 0.0
    %399 = vmatpush1.msra.mxu0 0.0
    %400 = vmatprep.subr.mxu0 0.0
    %401 = vmatpush1.msra.mxu0 0.0
    %402 = vmatprep.subr.mxu0 0.0
    %403 = vmatpush1.msra.mxu0 0.0
    %404 = vmatprep.subr.mxu0 0.0
    %405 = vmatpush1.msra.mxu0 0.0
    %406 = vmatprep.subr.mxu0 0.0
    %407 = vmatpush1.msra.mxu0 0.0
    %408 = vmatprep.subr.mxu0 0.0
    %409 = vmatpush1.msra.mxu0 0.0
    %410 = vmatprep.subr.mxu0 0.0
    %411 = vmatpush1.msra.mxu0 0.0
    %412 = vmatprep.subr.mxu0 0.0
    %413 = vmatpush1.msra.mxu0 0.0
    %414 = vmatprep.subr.mxu0 0.0
    %415 = vmatpush1.msra.mxu0 0.0
    %416 = vmatprep.mubr.f32.mxu0 0.0
    %417 = vmatmul.mubr.f32.gmra.mrb[0].mxu0 %v351
    %v418 = vpop.f32.mrb[0].mxu0
    %v419 = vadd.f32 0.0, %v418
    %v420 = vpop.f32.mrb[0].mxu0
    %421 = vdwg.mxu0
    %v423 = vsel %vm276, %v159, 0
    %v426 = vsel %vm276, %v160, 0
    %428 = vmatprep.subr.mxu0 0.0
    %429 = vmatpush1.msra.mxu0 %v165
    %430 = vmatprep.subr.mxu0 0.0
    %431 = vmatpush1.msra.mxu0 %v166
    %432 = vmatprep.subr.mxu0 0.0
    %433 = vmatpush1.msra.mxu0 %v167
    %434 = vmatprep.subr.mxu0 0.0
    %435 = vmatpush1.msra.mxu0 %v168
    %436 = vmatprep.subr.mxu0 0.0
    %437 = vmatpush1.msra.mxu0 0.0
    %438 = vmatprep.subr.mxu0 0.0
    %439 = vmatpush1.msra.mxu0 0.0
    %440 = vmatprep.subr.mxu0 0.0
    %441 = vmatpush1.msra.mxu0 0.0
    %442 = vmatprep.subr.mxu0 0.0
    %443 = vmatpush1.msra.mxu0 0.0
    %444 = vmatprep.subr.mxu0 0.0
    %445 = vmatpush1.msra.mxu0 0.0
    %446 = vmatprep.subr.mxu0 0.0
    %447 = vmatpush1.msra.mxu0 0.0
    %448 = vmatprep.subr.mxu0 0.0
    %449 = vmatpush1.msra.mxu0 0.0
    %450 = vmatprep.subr.mxu0 0.0
    %451 = vmatpush1.msra.mxu0 0.0
    %452 = vmatprep.subr.mxu0 0.0
    %453 = vmatpush1.msra.mxu0 0.0
    %454 = vmatprep.subr.mxu0 0.0
    %455 = vmatpush1.msra.mxu0 0.0
    %456 = vmatprep.subr.mxu0 0.0
    %457 = vmatpush1.msra.mxu0 0.0
    %458 = vmatprep.subr.mxu0 0.0
    %459 = vmatpush1.msra.mxu0 0.0
    %460 = vmatprep.subr.mxu0 0.0
    %461 = vmatpush1.msra.mxu0 0.0
    %462 = vmatprep.subr.mxu0 0.0
    %463 = vmatpush1.msra.mxu0 0.0
    %464 = vmatprep.subr.mxu0 0.0
    %465 = vmatpush1.msra.mxu0 0.0
    %466 = vmatprep.subr.mxu0 0.0
    %467 = vmatpush1.msra.mxu0 0.0
    %468 = vmatprep.subr.mxu0 0.0
    %469 = vmatpush1.msra.mxu0 0.0
    %470 = vmatprep.subr.mxu0 0.0
    %471 = vmatpush1.msra.mxu0 0.0
    %472 = vmatprep.subr.mxu0 0.0
    %473 = vmatpush1.msra.mxu0 0.0
    %474 = vmatprep.subr.mxu0 0.0
    %475 = vmatpush1.msra.mxu0 0.0
    %476 = vmatprep.subr.mxu0 0.0
    %477 = vmatpush1.msra.mxu0 0.0
    %478 = vmatprep.subr.mxu0 0.0
    %479 = vmatpush1.msra.mxu0 0.0
    %480 = vmatprep.subr.mxu0 0.0
    %481 = vmatpush1.msra.mxu0 0.0
    %482 = vmatprep.subr.mxu0 0.0
    %483 = vmatpush1.msra.mxu0 0.0
    %484 = vmatprep.subr.mxu0 0.0
    %485 = vmatpush1.msra.mxu0 0.0
    %486 = vmatprep.subr.mxu0 0.0
    %487 = vmatpush1.msra.mxu0 0.0
    %488 = vmatprep.subr.mxu0 0.0
    %489 = vmatpush1.msra.mxu0 0.0
    %490 = vmatprep.subr.mxu0 0.0
    %491 = vmatpush1.msra.mxu0 0.0
    %492 = vmatprep.mubr.f32.mxu0 0.0
    %493 = vmatmul.mubr.f32.gmra.mrb[0].mxu0 %v423
    %v494 = vpop.f32.mrb[0].mxu0
    %v495 = vadd.f32 0.0, %v494
    %v496 = vpop.f32.mrb[0].mxu0
    %497 = vmatprep.mubr.f32.mxu0 0.0
    %498 = vmatmul.mubr.f32.gmra.mrb[0].mxu0 %v426
    %v499 = vpop.f32.mrb[0].mxu0
    %v500 = vadd.f32 0.0, %v499
    %v501 = vpop.f32.mrb[0].mxu0
    %502 = vdwg.mxu0
    %503 = vmatprep.subr.mxu0 0.0
    %504 = vmatpush1.xpose.msra.mxu0 %v419
    %505 = vmatprep.subr.mxu0 0.0
    %506 = vmatpush1.xpose.msra.mxu0 0.0
    %507 = vmatprep.subr.mxu0 0.0
    %508 = vmatpush1.xpose.msra.mxu0 0.0
    %509 = vmatprep.subr.mxu0 0.0
    %510 = vmatpush1.xpose.msra.mxu0 0.0
    %511 = vmatprep.subr.mxu0 0.0
    %512 = vmatpush1.xpose.msra.mxu0 0.0
    %513 = vmatprep.subr.mxu0 0.0
    %514 = vmatpush1.xpose.msra.mxu0 0.0
    %515 = vmatprep.subr.mxu0 0.0
    %516 = vmatpush1.xpose.msra.mxu0 0.0
    %517 = vmatprep.subr.mxu0 0.0
    %518 = vmatpush1.xpose.msra.mxu0 0.0
    %519 = vmatprep.subr.mxu0 0.0
    %520 = vmatpush1.xpose.msra.mxu0 0.0
    %521 = vmatprep.subr.mxu0 0.0
    %522 = vmatpush1.xpose.msra.mxu0 0.0
    %523 = vmatprep.subr.mxu0 0.0
    %524 = vmatpush1.xpose.msra.mxu0 0.0
    %525 = vmatprep.subr.mxu0 0.0
    %526 = vmatpush1.xpose.msra.mxu0 0.0
    %527 = vmatprep.subr.mxu0 0.0
    %528 = vmatpush1.xpose.msra.mxu0 0.0
    %529 = vmatprep.subr.mxu0 0.0
    %530 = vmatpush1.xpose.msra.mxu0 0.0
    %531 = vmatprep.subr.mxu0 0.0
    %532 = vmatpush1.xpose.msra.mxu0 0.0
    %533 = vmatprep.subr.mxu0 0.0
    %534 = vmatpush1.xpose.msra.mxu0 0.0
    %535 = vmatprep.subr.mxu0 0.0
    %536 = vmatpush1.xpose.msra.mxu0 0.0
    %537 = vmatprep.subr.mxu0 0.0
    %538 = vmatpush1.xpose.msra.mxu0 0.0
    %539 = vmatprep.subr.mxu0 0.0
    %540 = vmatpush1.xpose.msra.mxu0 0.0
    %541 = vmatprep.subr.mxu0 0.0
    %542 = vmatpush1.xpose.msra.mxu0 0.0
    %543 = vmatprep.subr.mxu0 0.0
    %544 = vmatpush1.xpose.msra.mxu0 0.0
    %545 = vmatprep.subr.mxu0 0.0
    %546 = vmatpush1.xpose.msra.mxu0 0.0
    %547 = vmatprep.subr.mxu0 0.0
    %548 = vmatpush1.xpose.msra.mxu0 0.0
    %549 = vmatprep.subr.mxu0 0.0
    %550 = vmatpush1.xpose.msra.mxu0 0.0
    %551 = vmatprep.subr.mxu0 0.0
    %552 = vmatpush1.xpose.msra.mxu0 0.0
    %553 = vmatprep.subr.mxu0 0.0
    %554 = vmatpush1.xpose.msra.mxu0 0.0
    %555 = vmatprep.subr.mxu0 0.0
    %556 = vmatpush1.xpose.msra.mxu0 0.0
    %557 = vmatprep.subr.mxu0 0.0
    %558 = vmatpush1.xpose.msra.mxu0 0.0
    %559 = vmatprep.subr.mxu0 0.0
    %560 = vmatpush1.xpose.msra.mxu0 0.0
    %561 = vmatprep.subr.mxu0 0.0
    %562 = vmatpush1.xpose.msra.mxu0 0.0
    %563 = vmatprep.subr.mxu0 0.0
    %564 = vmatpush1.xpose.msra.mxu0 0.0
    %565 = vmatprep.subr.mxu0 0.0
    %566 = vmatpush1.xpose.msra.mxu0 0.0
    %567 = vmatprep.mubr.f32.mxu0 0.0
    %568 = vmatmul.mubr.f32.gmra.mrb[0].mxu0 %v186
    %v569 = vpop.f32.mrb[0].mxu0
    %v570 = vadd.f32 0.0, %v569
    %v571 = vpop.f32.mrb[0].mxu0
    %572 = vdwg.mxu0
    %573 = vmatprep.subr.mxu0 0.0
    %574 = vmatpush1.xpose.msra.mxu0 %v185
    %575 = vmatprep.subr.mxu0 0.0
    %576 = vmatpush1.xpose.msra.mxu0 0.0
    %577 = vmatprep.subr.mxu0 0.0
    %578 = vmatpush1.xpose.msra.mxu0 0.0
    %579 = vmatprep.subr.mxu0 0.0
    %580 = vmatpush1.xpose.msra.mxu0 0.0
    %581 = vmatprep.subr.mxu0 0.0
    %582 = vmatpush1.xpose.msra.mxu0 0.0
    %583 = vmatprep.subr.mxu0 0.0
    %584 = vmatpush1.xpose.msra.mxu0 0.0
    %585 = vmatprep.subr.mxu0 0.0
    %586 = vmatpush1.xpose.msra.mxu0 0.0
    %587 = vmatprep.subr.mxu0 0.0
    %588 = vmatpush1.xpose.msra.mxu0 0.0
    %589 = vmatprep.subr.mxu0 0.0
    %590 = vmatpush1.xpose.msra.mxu0 0.0
    %591 = vmatprep.subr.mxu0 0.0
    %592 = vmatpush1.xpose.msra.mxu0 0.0
    %593 = vmatprep.subr.mxu0 0.0
    %594 = vmatpush1.xpose.msra.mxu0 0.0
    %595 = vmatprep.subr.mxu0 0.0
    %596 = vmatpush1.xpose.msra.mxu0 0.0
    %597 = vmatprep.subr.mxu0 0.0
    %598 = vmatpush1.xpose.msra.mxu0 0.0
    %599 = vmatprep.subr.mxu0 0.0
    %600 = vmatpush1.xpose.msra.mxu0 0.0
    %601 = vmatprep.subr.mxu0 0.0
    %602 = vmatpush1.xpose.msra.mxu0 0.0
    %603 = vmatprep.subr.mxu0 0.0
    %604 = vmatpush1.xpose.msra.mxu0 0.0
    %605 = vmatprep.subr.mxu0 0.0
    %606 = vmatpush1.xpose.msra.mxu0 0.0
    %607 = vmatprep.subr.mxu0 0.0
    %608 = vmatpush1.xpose.msra.mxu0 0.0
    %609 = vmatprep.subr.mxu0 0.0
    %610 = vmatpush1.xpose.msra.mxu0 0.0
    %611 = vmatprep.subr.mxu0 0.0
    %612 = vmatpush1.xpose.msra.mxu0 0.0
    %613 = vmatprep.subr.mxu0 0.0
    %614 = vmatpush1.xpose.msra.mxu0 0.0
    %615 = vmatprep.subr.mxu0 0.0
    %616 = vmatpush1.xpose.msra.mxu0 0.0
    %617 = vmatprep.subr.mxu0 0.0
    %618 = vmatpush1.xpose.msra.mxu0 0.0
    %619 = vmatprep.subr.mxu0 0.0
    %620 = vmatpush1.xpose.msra.mxu0 0.0
    %621 = vmatprep.subr.mxu0 0.0
    %622 = vmatpush1.xpose.msra.mxu0 0.0
    %623 = vmatprep.subr.mxu0 0.0
    %624 = vmatpush1.xpose.msra.mxu0 0.0
    %625 = vmatprep.subr.mxu0 0.0
    %626 = vmatpush1.xpose.msra.mxu0 0.0
    %627 = vmatprep.subr.mxu0 0.0
    %628 = vmatpush1.xpose.msra.mxu0 0.0
    %629 = vmatprep.subr.mxu0 0.0
    %630 = vmatpush1.xpose.msra.mxu0 0.0
    %631 = vmatprep.subr.mxu0 0.0
    %632 = vmatpush1.xpose.msra.mxu0 0.0
    %633 = vmatprep.subr.mxu0 0.0
    %634 = vmatpush1.xpose.msra.mxu0 0.0
    %635 = vmatprep.subr.mxu0 0.0
    %636 = vmatpush1.xpose.msra.mxu0 0.0
    %637 = vmatprep.mubr.f32.mxu0 0.0
    %638 = vmatmul.mubr.f32.gmra.mrb[0].mxu0 %v495
    %v639 = vpop.f32.mrb[0].mxu0
    %v640 = vadd.f32 0.0, %v639
    %v641 = vpop.f32.mrb[0].mxu0
    %642 = vmatprep.mubr.f32.mxu0 0.0
    %643 = vmatmul.mubr.f32.gmra.mrb[0].mxu0 %v500
    %v644 = vpop.f32.mrb[0].mxu0
    %v645 = vadd.f32 0.0, %v644
    %v646 = vpop.f32.mrb[0].mxu0
    %647 = vdwg.mxu0
    %v648 = vlaneseq
    %v649 = vshrl.u32 %v648, 7
    %v650 = vsub.s32 0, %v649
    %v651 = vrot.slane %v570, %v650
    %653 = vset.pattern.permute.xlu0 0
    %654 = vperm.xlu0 %653, %v640
    %v655 = vpop.permute.xlu0 %654
    %658 = vset.pattern.permute.xlu0 0
    %659 = vperm.xlu0 %658, %v645
    %v660 = vpop.permute.xlu0 %659
    %v662 = vadd.f32 %v651, %v655
    %v663 = vadd.f32 %v651, %v660
    %v664 = vrcp.pop 8.0
    %v665 = vmul.f32 %v662, %v664
    %v666 = vmul.f32 %v663, %v664
    %v667 = vtanh.pop %v665
    %v668 = vtanh.pop %v666
    %v669 = vmul.f32 %v667, 8.0
    %v670 = vmul.f32 %v668, 8.0
    %vm671 = vcmp.gt.f32.partialorder %v669, 0.0
    %vm672 = vcmp.gt.f32.partialorder %v670, 0.0
    %v673 = vmul.f32 %v669, 0.1
    %v674 = vmul.f32 %v670, 0.1
    %v675 = vsel %vm671, %v669, %v673
    %v676 = vsel %vm672, %v670, %v674
    %v677 = vmul.f32 %v675, 1.442695
    %v678 = vpow.pop %v677
    %v679 = vmul.f32 %v676, 1.442695
    %v680 = vpow.pop %v679
    %v681 = vmul.f32 %v678, %v58
    %v682 = vmul.f32 %v680, %v59
    %vm683 = vcmask 64512
    %v684 = vsel %vm683, %v681, 0.0
    %685 = vadd.xlane.f32.xlu0 %v684
    %v686 = vpop.xlane.xlu0 %685
    %v687 = vsel %vm683, %v682, 0.0
    %688 = vadd.xlane.f32.xlu0 %v687
    %v689 = vpop.xlane.xlu0 %688
    %v690 = vrcp.pop %v686
    %v691 = vmul.f32 %v681, %v690
    %v692 = vrcp.pop %v689
    %v693 = vmul.f32 %v682, %v692
    %v695 = vsel %vm683, %v691, 0
    %v698 = vsel %vm683, %v693, 0
    %700 = vmatprep.subr.mxu0 0.0
    %701 = vmatpush1.msra.mxu0 %v419
    %702 = vmatprep.subr.mxu0 0.0
    %703 = vmatpush1.msra.mxu0 0.0
    %704 = vmatprep.subr.mxu0 0.0
    %705 = vmatpush1.msra.mxu0 0.0
    %706 = vmatprep.subr.mxu0 0.0
    %707 = vmatpush1.msra.mxu0 0.0
    %708 = vmatprep.subr.mxu0 0.0
    %709 = vmatpush1.msra.mxu0 0.0
    %710 = vmatprep.subr.mxu0 0.0
    %711 = vmatpush1.msra.mxu0 0.0
    %712 = vmatprep.subr.mxu0 0.0
    %713 = vmatpush1.msra.mxu0 0.0
    %714 = vmatprep.subr.mxu0 0.0
    %715 = vmatpush1.msra.mxu0 0.0
    %716 = vmatprep.subr.mxu0 0.0
    %717 = vmatpush1.msra.mxu0 0.0
    %718 = vmatprep.subr.mxu0 0.0
    %719 = vmatpush1.msra.mxu0 0.0
    %720 = vmatprep.subr.mxu0 0.0
    %721 = vmatpush1.msra.mxu0 0.0
    %722 = vmatprep.subr.mxu0 0.0
    %723 = vmatpush1.msra.mxu0 0.0
    %724 = vmatprep.subr.mxu0 0.0
    %725 = vmatpush1.msra.mxu0 0.0
    %726 = vmatprep.subr.mxu0 0.0
    %727 = vmatpush1.msra.mxu0 0.0
    %728 = vmatprep.subr.mxu0 0.0
    %729 = vmatpush1.msra.mxu0 0.0
    %730 = vmatprep.subr.mxu0 0.0
    %731 = vmatpush1.msra.mxu0 0.0
    %732 = vmatprep.subr.mxu0 0.0
    %733 = vmatpush1.msra.mxu0 0.0
    %734 = vmatprep.subr.mxu0 0.0
    %735 = vmatpush1.msra.mxu0 0.0
    %736 = vmatprep.subr.mxu0 0.0
    %737 = vmatpush1.msra.mxu0 0.0
    %738 = vmatprep.subr.mxu0 0.0
    %739 = vmatpush1.msra.mxu0 0.0
    %740 = vmatprep.subr.mxu0 0.0
    %741 = vmatpush1.msra.mxu0 0.0
    %742 = vmatprep.subr.mxu0 0.0
    %743 = vmatpush1.msra.mxu0 0.0
    %744 = vmatprep.subr.mxu0 0.0
    %745 = vmatpush1.msra.mxu0 0.0
    %746 = vmatprep.subr.mxu0 0.0
    %747 = vmatpush1.msra.mxu0 0.0
    %748 = vmatprep.subr.mxu0 0.0
    %749 = vmatpush1.msra.mxu0 0.0
    %750 = vmatprep.subr.mxu0 0.0
    %751 = vmatpush1.msra.mxu0 0.0
    %752 = vmatprep.subr.mxu0 0.0
    %753 = vmatpush1.msra.mxu0 0.0
    %754 = vmatprep.subr.mxu0 0.0
    %755 = vmatpush1.msra.mxu0 0.0
    %756 = vmatprep.subr.mxu0 0.0
    %757 = vmatpush1.msra.mxu0 0.0
    %758 = vmatprep.subr.mxu0 0.0
    %759 = vmatpush1.msra.mxu0 0.0
    %760 = vmatprep.subr.mxu0 0.0
    %761 = vmatpush1.msra.mxu0 0.0
    %762 = vmatprep.subr.mxu0 0.0
    %763 = vmatpush1.msra.mxu0 0.0
    %764 = vmatprep.mubr.f32.mxu0 0.0
    %765 = vmatmul.mubr.f32.gmra.mrb[0].mxu0 %v695
    %v766 = vpop.f32.mrb[0].mxu0
    %v767 = vadd.f32 0.0, %v766
    %v768 = vpop.f32.mrb[0].mxu0
    %769 = vmatprep.mubr.f32.mxu0 0.0
    %770 = vmatmul.mubr.f32.gmra.mrb[0].mxu0 %v698
    %v771 = vpop.f32.mrb[0].mxu0
    %v772 = vadd.f32 0.0, %v771
    %v773 = vpop.f32.mrb[0].mxu0
    %774 = vdwg.mxu0
    %vm775 = vcmp.gt.f32.partialorder %v767, 0.0
    %vm776 = vcmp.gt.f32.partialorder %v772, 0.0
    %v777 = vmul.f32 %v767, 0.1
    %v778 = vmul.f32 %v772, 0.1
    %v779 = vsel %vm775, %v767, %v777
    %v780 = vsel %vm776, %v772, %v778
    %v781 = vlaneseq
    %v782 = vshrl.u32 %v781, 7
    %v783 = vsub.s32 1, %v782
    %v784 = vrot.slane %v570, %v783
    %785 = vset.pattern.permute.xlu0 1
    %786 = vperm.xlu0 %785, %v640
    %v787 = vpop.permute.xlu0 %786
    %789 = vset.pattern.permute.xlu0 1
    %790 = vperm.xlu0 %789, %v645
    %v791 = vpop.permute.xlu0 %790
    %v793 = vadd.f32 %v784, %v787
    %v794 = vadd.f32 %v784, %v791
    %v795 = vmul.f32 %v793, %v664
    %v796 = vmul.f32 %v794, %v664
    %v797 = vtanh.pop %v795
    %v798 = vtanh.pop %v796
    %v799 = vmul.f32 %v797, 8.0
    %v800 = vmul.f32 %v798, 8.0
    %vm801 = vcmp.gt.f32.partialorder %v799, 0.0
    %vm802 = vcmp.gt.f32.partialorder %v800, 0.0
    %v803 = vmul.f32 %v799, 0.1
    %v804 = vmul.f32 %v800, 0.1
    %v805 = vsel %vm801, %v799, %v803
    %v806 = vsel %vm802, %v800, %v804
    %v807 = vmul.f32 %v805, 1.442695
    %v808 = vpow.pop %v807
    %v809 = vmul.f32 %v806, 1.442695
    %v810 = vpow.pop %v809
    %v811 = vmul.f32 %v808, %v58
    %v812 = vmul.f32 %v810, %v59
    %v813 = vsel %vm683, %v811, 0.0
    %814 = vadd.xlane.f32.xlu0 %v813
    %v815 = vpop.xlane.xlu0 %814
    %v816 = vsel %vm683, %v812, 0.0
    %817 = vadd.xlane.f32.xlu0 %v816
    %v818 = vpop.xlane.xlu0 %817
    %v819 = vrcp.pop %v815
    %v820 = vmul.f32 %v811, %v819
    %v821 = vrcp.pop %v818
    %v822 = vmul.f32 %v812, %v821
    %824 = vrot.lane.b32.xlu0 %v419, 96
    %v825 = vpop.permute.xlu0 %824
    %v828 = vsel %vm683, %v820, 0
    %v831 = vsel %vm683, %v822, 0
    %833 = vmatprep.subr.mxu0 0.0
    %834 = vmatpush1.msra.mxu0 %v825
    %835 = vmatprep.subr.mxu0 0.0
    %836 = vmatpush1.msra.mxu0 0.0
    %837 = vmatprep.subr.mxu0 0.0
    %838 = vmatpush1.msra.mxu0 0.0
    %839 = vmatprep.subr.mxu0 0.0
    %840 = vmatpush1.msra.mxu0 0.0
    %841 = vmatprep.subr.mxu0 0.0
    %842 = vmatpush1.msra.mxu0 0.0
    %843 = vmatprep.subr.mxu0 0.0
    %844 = vmatpush1.msra.mxu0 0.0
    %845 = vmatprep.subr.mxu0 0.0
    %846 = vmatpush1.msra.mxu0 0.0
    %847 = vmatprep.subr.mxu0 0.0
    %848 = vmatpush1.msra.mxu0 0.0
    %849 = vmatprep.subr.mxu0 0.0
    %850 = vmatpush1.msra.mxu0 0.0
    %851 = vmatprep.subr.mxu0 0.0
    %852 = vmatpush1.msra.mxu0 0.0
    %853 = vmatprep.subr.mxu0 0.0
    %854 = vmatpush1.msra.mxu0 0.0
    %855 = vmatprep.subr.mxu0 0.0
    %856 = vmatpush1.msra.mxu0 0.0
    %857 = vmatprep.subr.mxu0 0.0
    %858 = vmatpush1.msra.mxu0 0.0
    %859 = vmatprep.subr.mxu0 0.0
    %860 = vmatpush1.msra.mxu0 0.0
    %861 = vmatprep.subr.mxu0 0.0
    %862 = vmatpush1.msra.mxu0 0.0
    %863 = vmatprep.subr.mxu0 0.0
    %864 = vmatpush1.msra.mxu0 0.0
    %865 = vmatprep.subr.mxu0 0.0
    %866 = vmatpush1.msra.mxu0 0.0
    %867 = vmatprep.subr.mxu0 0.0
    %868 = vmatpush1.msra.mxu0 0.0
    %869 = vmatprep.subr.mxu0 0.0
    %870 = vmatpush1.msra.mxu0 0.0
    %871 = vmatprep.subr.mxu0 0.0
    %872 = vmatpush1.msra.mxu0 0.0
    %873 = vmatprep.subr.mxu0 0.0
    %874 = vmatpush1.msra.mxu0 0.0
    %875 = vmatprep.subr.mxu0 0.0
    %876 = vmatpush1.msra.mxu0 0.0
    %877 = vmatprep.subr.mxu0 0.0
    %878 = vmatpush1.msra.mxu0 0.0
    %879 = vmatprep.subr.mxu0 0.0
    %880 = vmatpush1.msra.mxu0 0.0
    %881 = vmatprep.subr.mxu0 0.0
    %882 = vmatpush1.msra.mxu0 0.0
    %883 = vmatprep.subr.mxu0 0.0
    %884 = vmatpush1.msra.mxu0 0.0
    %885 = vmatprep.subr.mxu0 0.0
    %886 = vmatpush1.msra.mxu0 0.0
    %887 = vmatprep.subr.mxu0 0.0
    %888 = vmatpush1.msra.mxu0 0.0
    %889 = vmatprep.subr.mxu0 0.0
    %890 = vmatpush1.msra.mxu0 0.0
    %891 = vmatprep.subr.mxu0 0.0
    %892 = vmatpush1.msra.mxu0 0.0
    %893 = vmatprep.subr.mxu0 0.0
    %894 = vmatpush1.msra.mxu0 0.0
    %895 = vmatprep.subr.mxu0 0.0
    %896 = vmatpush1.msra.mxu0 0.0
    %897 = vmatprep.mubr.f32.mxu0 0.0
    %898 = vmatmul.mubr.f32.gmra.mrb[0].mxu0 %v828
    %v899 = vpop.f32.mrb[0].mxu0
    %v900 = vadd.f32 0.0, %v899
    %v901 = vpop.f32.mrb[0].mxu0
    %902 = vmatprep.mubr.f32.mxu0 0.0
    %903 = vmatmul.mubr.f32.gmra.mrb[0].mxu0 %v831
    %v904 = vpop.f32.mrb[0].mxu0
    %v905 = vadd.f32 0.0, %v904
    %v906 = vpop.f32.mrb[0].mxu0
    %907 = vdwg.mxu0
    %vm908 = vcmp.gt.f32.partialorder %v900, 0.0
    %vm909 = vcmp.gt.f32.partialorder %v905, 0.0
    %v910 = vmul.f32 %v900, 0.1
    %v911 = vmul.f32 %v905, 0.1
    %v912 = vsel %vm908, %v900, %v910
    %v913 = vsel %vm909, %v905, %v911
    %v914 = vlaneseq
    %v915 = vshrl.u32 %v914, 7
    %v916 = vsub.s32 2, %v915
    %v917 = vrot.slane %v570, %v916
    %918 = vset.pattern.permute.xlu0 2
    %919 = vperm.xlu0 %918, %v640
    %v920 = vpop.permute.xlu0 %919
    %922 = vset.pattern.permute.xlu0 2
    %923 = vperm.xlu0 %922, %v645
    %v924 = vpop.permute.xlu0 %923
    %v926 = vadd.f32 %v917, %v920
    %v927 = vadd.f32 %v917, %v924
    %v928 = vmul.f32 %v926, %v664
    %v929 = vmul.f32 %v927, %v664
    %v930 = vtanh.pop %v928
    %v931 = vtanh.pop %v929
    %v932 = vmul.f32 %v930, 8.0
    %v933 = vmul.f32 %v931, 8.0
    %vm934 = vcmp.gt.f32.partialorder %v932, 0.0
    %vm935 = vcmp.gt.f32.partialorder %v933, 0.0
    %v936 = vmul.f32 %v932, 0.1
    %v937 = vmul.f32 %v933, 0.1
    %v938 = vsel %vm934, %v932, %v936
    %v939 = vsel %vm935, %v933, %v937
    %v940 = vmul.f32 %v938, 1.442695
    %v941 = vpow.pop %v940
    %v942 = vmul.f32 %v939, 1.442695
    %v943 = vpow.pop %v942
    %v944 = vmul.f32 %v941, %v58
    %v945 = vmul.f32 %v943, %v59
    %v946 = vsel %vm683, %v944, 0.0
    %947 = vadd.xlane.f32.xlu0 %v946
    %v948 = vpop.xlane.xlu0 %947
    %v949 = vsel %vm683, %v945, 0.0
    %950 = vadd.xlane.f32.xlu0 %v949
    %v951 = vpop.xlane.xlu0 %950
    %v952 = vrcp.pop %v948
    %v953 = vmul.f32 %v944, %v952
    %v954 = vrcp.pop %v951
    %v955 = vmul.f32 %v945, %v954
    %956 = vrot.lane.b32.xlu0 %v419, 64
    %v957 = vpop.permute.xlu0 %956
    %v960 = vsel %vm683, %v953, 0
    %v963 = vsel %vm683, %v955, 0
    %965 = vmatprep.subr.mxu0 0.0
    %966 = vmatpush1.msra.mxu0 %v957
    %967 = vmatprep.subr.mxu0 0.0
    %968 = vmatpush1.msra.mxu0 0.0
    %969 = vmatprep.subr.mxu0 0.0
    %970 = vmatpush1.msra.mxu0 0.0
    %971 = vmatprep.subr.mxu0 0.0
    %972 = vmatpush1.msra.mxu0 0.0
    %973 = vmatprep.subr.mxu0 0.0
    %974 = vmatpush1.msra.mxu0 0.0
    %975 = vmatprep.subr.mxu0 0.0
    %976 = vmatpush1.msra.mxu0 0.0
    %977 = vmatprep.subr.mxu0 0.0
    %978 = vmatpush1.msra.mxu0 0.0
    %979 = vmatprep.subr.mxu0 0.0
    %980 = vmatpush1.msra.mxu0 0.0
    %981 = vmatprep.subr.mxu0 0.0
    %982 = vmatpush1.msra.mxu0 0.0
    %983 = vmatprep.subr.mxu0 0.0
    %984 = vmatpush1.msra.mxu0 0.0
    %985 = vmatprep.subr.mxu0 0.0
    %986 = vmatpush1.msra.mxu0 0.0
    %987 = vmatprep.subr.mxu0 0.0
    %988 = vmatpush1.msra.mxu0 0.0
    %989 = vmatprep.subr.mxu0 0.0
    %990 = vmatpush1.msra.mxu0 0.0
    %991 = vmatprep.subr.mxu0 0.0
    %992 = vmatpush1.msra.mxu0 0.0
    %993 = vmatprep.subr.mxu0 0.0
    %994 = vmatpush1.msra.mxu0 0.0
    %995 = vmatprep.subr.mxu0 0.0
    %996 = vmatpush1.msra.mxu0 0.0
    %997 = vmatprep.subr.mxu0 0.0
    %998 = vmatpush1.msra.mxu0 0.0
    %999 = vmatprep.subr.mxu0 0.0
    %1000 = vmatpush1.msra.mxu0 0.0
    %1001 = vmatprep.subr.mxu0 0.0
    %1002 = vmatpush1.msra.mxu0 0.0
    %1003 = vmatprep.subr.mxu0 0.0
    %1004 = vmatpush1.msra.mxu0 0.0
    %1005 = vmatprep.subr.mxu0 0.0
    %1006 = vmatpush1.msra.mxu0 0.0
    %1007 = vmatprep.subr.mxu0 0.0
    %1008 = vmatpush1.msra.mxu0 0.0
    %1009 = vmatprep.subr.mxu0 0.0
    %1010 = vmatpush1.msra.mxu0 0.0
    %1011 = vmatprep.subr.mxu0 0.0
    %1012 = vmatpush1.msra.mxu0 0.0
    %1013 = vmatprep.subr.mxu0 0.0
    %1014 = vmatpush1.msra.mxu0 0.0
    %1015 = vmatprep.subr.mxu0 0.0
    %1016 = vmatpush1.msra.mxu0 0.0
    %1017 = vmatprep.subr.mxu0 0.0
    %1018 = vmatpush1.msra.mxu0 0.0
    %1019 = vmatprep.subr.mxu0 0.0
    %1020 = vmatpush1.msra.mxu0 0.0
    %1021 = vmatprep.subr.mxu0 0.0
    %1022 = vmatpush1.msra.mxu0 0.0
    %1023 = vmatprep.subr.mxu0 0.0
    %1024 = vmatpush1.msra.mxu0 0.0
    %1025 = vmatprep.subr.mxu0 0.0
    %1026 = vmatpush1.msra.mxu0 0.0
    %1027 = vmatprep.subr.mxu0 0.0
    %1028 = vmatpush1.msra.mxu0 0.0
    %1029 = vmatprep.mubr.f32.mxu0 0.0
    %1030 = vmatmul.mubr.f32.gmra.mrb[0].mxu0 %v960
    %v1031 = vpop.f32.mrb[0].mxu0
    %v1032 = vadd.f32 0.0, %v1031
    %v1033 = vpop.f32.mrb[0].mxu0
    %1034 = vmatprep.mubr.f32.mxu0 0.0
    %1035 = vmatmul.mubr.f32.gmra.mrb[0].mxu0 %v963
    %v1036 = vpop.f32.mrb[0].mxu0
    %v1037 = vadd.f32 0.0, %v1036
    %v1038 = vpop.f32.mrb[0].mxu0
    %1039 = vdwg.mxu0
    %vm1040 = vcmp.gt.f32.partialorder %v1032, 0.0
    %vm1041 = vcmp.gt.f32.partialorder %v1037, 0.0
    %v1042 = vmul.f32 %v1032, 0.1
    %v1043 = vmul.f32 %v1037, 0.1
    %v1044 = vsel %vm1040, %v1032, %v1042
    %v1045 = vsel %vm1041, %v1037, %v1043
    %v1046 = vlaneseq
    %v1047 = vshrl.u32 %v1046, 7
    %v1048 = vsub.s32 3, %v1047
    %v1049 = vrot.slane %v570, %v1048
    %1050 = vset.pattern.permute.xlu0 3
    %1051 = vperm.xlu0 %1050, %v640
    %v1052 = vpop.permute.xlu0 %1051
    %1054 = vset.pattern.permute.xlu0 3
    %1055 = vperm.xlu0 %1054, %v645
    %v1056 = vpop.permute.xlu0 %1055
    %v1058 = vadd.f32 %v1049, %v1052
    %v1059 = vadd.f32 %v1049, %v1056
    %v1060 = vmul.f32 %v1058, %v664
    %v1061 = vmul.f32 %v1059, %v664
    %v1062 = vtanh.pop %v1060
    %v1063 = vtanh.pop %v1061
    %v1064 = vmul.f32 %v1062, 8.0
    %v1065 = vmul.f32 %v1063, 8.0
    %vm1066 = vcmp.gt.f32.partialorder %v1064, 0.0
    %vm1067 = vcmp.gt.f32.partialorder %v1065, 0.0
    %v1068 = vmul.f32 %v1064, 0.1
    %v1069 = vmul.f32 %v1065, 0.1
    %v1070 = vsel %vm1066, %v1064, %v1068
    %v1071 = vsel %vm1067, %v1065, %v1069
    %v1072 = vmul.f32 %v1070, 1.442695
    %v1073 = vpow.pop %v1072
    %v1074 = vmul.f32 %v1071, 1.442695
    %v1075 = vpow.pop %v1074
    %v1076 = vmul.f32 %v1073, %v58
    %v1077 = vmul.f32 %v1075, %v59
    %v1078 = vsel %vm683, %v1076, 0.0
    %1079 = vadd.xlane.f32.xlu0 %v1078
    %v1080 = vpop.xlane.xlu0 %1079
    %v1081 = vsel %vm683, %v1077, 0.0
    %1082 = vadd.xlane.f32.xlu0 %v1081
    %v1083 = vpop.xlane.xlu0 %1082
    %v1084 = vrcp.pop %v1080
    %v1085 = vmul.f32 %v1076, %v1084
    %v1086 = vrcp.pop %v1083
    %v1087 = vmul.f32 %v1077, %v1086
    %1088 = vrot.lane.b32.xlu0 %v419, 32
    %v1089 = vpop.permute.xlu0 %1088
    %v1092 = vsel %vm683, %v1085, 0
    %v1095 = vsel %vm683, %v1087, 0
    %1097 = vmatprep.subr.mxu0 0.0
    %1098 = vmatpush1.msra.mxu0 %v1089
    %1099 = vmatprep.subr.mxu0 0.0
    %1100 = vmatpush1.msra.mxu0 0.0
    %1101 = vmatprep.subr.mxu0 0.0
    %1102 = vmatpush1.msra.mxu0 0.0
    %1103 = vmatprep.subr.mxu0 0.0
    %1104 = vmatpush1.msra.mxu0 0.0
    %1105 = vmatprep.subr.mxu0 0.0
    %1106 = vmatpush1.msra.mxu0 0.0
    %1107 = vmatprep.subr.mxu0 0.0
    %1108 = vmatpush1.msra.mxu0 0.0
    %1109 = vmatprep.subr.mxu0 0.0
    %1110 = vmatpush1.msra.mxu0 0.0
    %1111 = vmatprep.subr.mxu0 0.0
    %1112 = vmatpush1.msra.mxu0 0.0
    %1113 = vmatprep.subr.mxu0 0.0
    %1114 = vmatpush1.msra.mxu0 0.0
    %1115 = vmatprep.subr.mxu0 0.0
    %1116 = vmatpush1.msra.mxu0 0.0
    %1117 = vmatprep.subr.mxu0 0.0
    %1118 = vmatpush1.msra.mxu0 0.0
    %1119 = vmatprep.subr.mxu0 0.0
    %1120 = vmatpush1.msra.mxu0 0.0
    %1121 = vmatprep.subr.mxu0 0.0
    %1122 = vmatpush1.msra.mxu0 0.0
    %1123 = vmatprep.subr.mxu0 0.0
    %1124 = vmatpush1.msra.mxu0 0.0
    %1125 = vmatprep.subr.mxu0 0.0
    %1126 = vmatpush1.msra.mxu0 0.0
    %1127 = vmatprep.subr.mxu0 0.0
    %1128 = vmatpush1.msra.mxu0 0.0
    %1129 = vmatprep.subr.mxu0 0.0
    %1130 = vmatpush1.msra.mxu0 0.0
    %1131 = vmatprep.subr.mxu0 0.0
    %1132 = vmatpush1.msra.mxu0 0.0
    %1133 = vmatprep.subr.mxu0 0.0
    %1134 = vmatpush1.msra.mxu0 0.0
    %1135 = vmatprep.subr.mxu0 0.0
    %1136 = vmatpush1.msra.mxu0 0.0
    %1137 = vmatprep.subr.mxu0 0.0
    %1138 = vmatpush1.msra.mxu0 0.0
    %1139 = vmatprep.subr.mxu0 0.0
    %1140 = vmatpush1.msra.mxu0 0.0
    %1141 = vmatprep.subr.mxu0 0.0
    %1142 = vmatpush1.msra.mxu0 0.0
    %1143 = vmatprep.subr.mxu0 0.0
    %1144 = vmatpush1.msra.mxu0 0.0
    %1145 = vmatprep.subr.mxu0 0.0
    %1146 = vmatpush1.msra.mxu0 0.0
    %1147 = vmatprep.subr.mxu0 0.0
    %1148 = vmatpush1.msra.mxu0 0.0
    %1149 = vmatprep.subr.mxu0 0.0
    %1150 = vmatpush1.msra.mxu0 0.0
    %1151 = vmatprep.subr.mxu0 0.0
    %1152 = vmatpush1.msra.mxu0 0.0
    %1153 = vmatprep.subr.mxu0 0.0
    %1154 = vmatpush1.msra.mxu0 0.0
    %1155 = vmatprep.subr.mxu0 0.0
    %1156 = vmatpush1.msra.mxu0 0.0
    %1157 = vmatprep.subr.mxu0 0.0
    %1158 = vmatpush1.msra.mxu0 0.0
    %1159 = vmatprep.subr.mxu0 0.0
    %1160 = vmatpush1.msra.mxu0 0.0
    %1161 = vmatprep.mubr.f32.mxu0 0.0
    %1162 = vmatmul.mubr.f32.gmra.mrb[0].mxu0 %v1092
    %v1163 = vpop.f32.mrb[0].mxu0
    %v1164 = vadd.f32 0.0, %v1163
    %v1165 = vpop.f32.mrb[0].mxu0
    %1166 = vmatprep.mubr.f32.mxu0 0.0
    %1167 = vmatmul.mubr.f32.gmra.mrb[0].mxu0 %v1095
    %v1168 = vpop.f32.mrb[0].mxu0
    %v1169 = vadd.f32 0.0, %v1168
    %v1170 = vpop.f32.mrb[0].mxu0
    %1171 = vdwg.mxu0
    %vm1172 = vcmp.gt.f32.partialorder %v1164, 0.0
    %vm1173 = vcmp.gt.f32.partialorder %v1169, 0.0
    %v1174 = vmul.f32 %v1164, 0.1
    %v1175 = vmul.f32 %v1169, 0.1
    %v1176 = vsel %vm1172, %v1164, %v1174
    %v1177 = vsel %vm1173, %v1169, %v1175
    %1180 = vrot.lane.b32.xlu0 %v912, 32
    %v1181 = vpop.permute.xlu0 %1180
    %1182 = vrot.lane.b32.xlu0 %v913, 32
    %v1183 = vpop.permute.xlu0 %1182
    %1188 = vrot.lane.b32.xlu0 %v1044, 64
    %v1189 = vpop.permute.xlu0 %1188
    %1190 = vrot.lane.b32.xlu0 %v1045, 64
    %v1191 = vpop.permute.xlu0 %1190
    %1196 = vrot.lane.b32.xlu0 %v1176, 96
    %v1197 = vpop.permute.xlu0 %1196
    %1198 = vrot.lane.b32.xlu0 %v1177, 96
    %v1199 = vpop.permute.xlu0 %1198
    %v1202 = vsel %vm276, %v779, %v1181
    %v1203 = vsel %vm276, %v780, %v1183
    %vm1204 = vcmask 523264
    %v1205 = vsel %vm1204, %v1202, %v1189
    %v1206 = vsel %vm1204, %v1203, %v1191
    %vm1207 = vcmask 785408
    %v1208 = vsel %vm1207, %v1205, %v1197
    %v1209 = vsel %vm1207, %v1206, %v1199
    %1210 = vmatprep.subr.mxu0 0.0
    %1211 = vmatpush1.msra.mxu0 %v187
    %1212 = vmatprep.subr.mxu0 0.0
    %1213 = vmatpush1.msra.mxu0 %v188
    %1214 = vmatprep.subr.mxu0 0.0
    %1215 = vmatpush1.msra.mxu0 %v189
    %1216 = vmatprep.subr.mxu0 0.0
    %1217 = vmatpush1.msra.mxu0 %v190
    %1218 = vmatprep.subr.mxu0 0.0
    %1219 = vmatpush1.msra.mxu0 %v191
    %1220 = vmatprep.subr.mxu0 0.0
    %1221 = vmatpush1.msra.mxu0 %v192
    %1222 = vmatprep.subr.mxu0 0.0
    %1223 = vmatpush1.msra.mxu0 %v193
    %1224 = vmatprep.subr.mxu0 0.0
    %1225 = vmatpush1.msra.mxu0 %v194
    %1226 = vmatprep.subr.mxu0 0.0
    %1227 = vmatpush1.msra.mxu0 %v195
    %1228 = vmatprep.subr.mxu0 0.0
    %1229 = vmatpush1.msra.mxu0 %v196
    %1230 = vmatprep.subr.mxu0 0.0
    %1231 = vmatpush1.msra.mxu0 %v197
    %1232 = vmatprep.subr.mxu0 0.0
    %1233 = vmatpush1.msra.mxu0 %v198
    %1234 = vmatprep.subr.mxu0 0.0
    %1235 = vmatpush1.msra.mxu0 %v199
    %1236 = vmatprep.subr.mxu0 0.0
    %1237 = vmatpush1.msra.mxu0 %v200
    %1238 = vmatprep.subr.mxu0 0.0
    %1239 = vmatpush1.msra.mxu0 %v201
    %1240 = vmatprep.subr.mxu0 0.0
    %1241 = vmatpush1.msra.mxu0 %v202
    %1242 = vmatprep.subr.mxu0 0.0
    %1243 = vmatpush1.msra.mxu0 0.0
    %1244 = vmatprep.subr.mxu0 0.0
    %1245 = vmatpush1.msra.mxu0 0.0
    %1246 = vmatprep.subr.mxu0 0.0
    %1247 = vmatpush1.msra.mxu0 0.0
    %1248 = vmatprep.subr.mxu0 0.0
    %1249 = vmatpush1.msra.mxu0 0.0
    %1250 = vmatprep.subr.mxu0 0.0
    %1251 = vmatpush1.msra.mxu0 0.0
    %1252 = vmatprep.subr.mxu0 0.0
    %1253 = vmatpush1.msra.mxu0 0.0
    %1254 = vmatprep.subr.mxu0 0.0
    %1255 = vmatpush1.msra.mxu0 0.0
    %1256 = vmatprep.subr.mxu0 0.0
    %1257 = vmatpush1.msra.mxu0 0.0
    %1258 = vmatprep.subr.mxu0 0.0
    %1259 = vmatpush1.msra.mxu0 0.0
    %1260 = vmatprep.subr.mxu0 0.0
    %1261 = vmatpush1.msra.mxu0 0.0
    %1262 = vmatprep.subr.mxu0 0.0
    %1263 = vmatpush1.msra.mxu0 0.0
    %1264 = vmatprep.subr.mxu0 0.0
    %1265 = vmatpush1.msra.mxu0 0.0
    %1266 = vmatprep.subr.mxu0 0.0
    %1267 = vmatpush1.msra.mxu0 0.0
    %1268 = vmatprep.subr.mxu0 0.0
    %1269 = vmatpush1.msra.mxu0 0.0
    %1270 = vmatprep.subr.mxu0 0.0
    %1271 = vmatpush1.msra.mxu0 0.0
    %1272 = vmatprep.subr.mxu0 0.0
    %1273 = vmatpush1.msra.mxu0 0.0
    %1274 = vmatprep.mubr.f32.mxu0 0.0
    %1275 = vmatmul.mubr.f32.gmra.mrb[0].mxu0 %v1208
    %v1276 = vpop.f32.mrb[0].mxu0
    %v1277 = vadd.f32 0.0, %v1276
    %v1278 = vpop.f32.mrb[0].mxu0
    %1279 = vmatprep.mubr.f32.mxu0 0.0
    %1280 = vmatmul.mubr.f32.gmra.mrb[0].mxu0 %v1209
    %v1281 = vpop.f32.mrb[0].mxu0
    %v1282 = vadd.f32 0.0, %v1281
    %v1283 = vpop.f32.mrb[0].mxu0
    %1284 = vdwg.mxu0
    %vm1285 = vcmp.gt.f32.partialorder %v1277, 0.0
    %vm1286 = vcmp.gt.f32.partialorder %v1282, 0.0
    %v1287 = vmul.f32 %v1277, 0.1
    %v1288 = vmul.f32 %v1282, 0.1
    %v1289 = vsel %vm1285, %v1277, %v1287
    %v1290 = vsel %vm1286, %v1282, %v1288
    %v1291 = vld [vmem:[%s11] sm:$0xff]
    %v1292 = vld [vmem:[%s11 + $0x8] sm:$0xff]
    %v1293 = vld [vmem:[%s11 + $0x10] sm:$0xff]
    %v1294 = vld [vmem:[%s11 + $0x18] sm:$0xff]
    %v1295 = vld [vmem:[%s12] sm:$0x1]
    %v1297 = vlaneseq
    %v1298 = vshrl.u32 %v1297, 7
    %v1299 = vsub.s32 0, %v1298
    %v1300 = vrot.slane %v1295, %v1299
    %v1303 = vsel %vm276, %v1289, 0
    %v1306 = vsel %vm276, %v1290, 0
    %1308 = vmatprep.subr.mxu0 0.0
    %1309 = vmatpush1.msra.mxu0 %v1291
    %1310 = vmatprep.subr.mxu0 0.0
    %1311 = vmatpush1.msra.mxu0 %v1292
    %1312 = vmatprep.subr.mxu0 0.0
    %1313 = vmatpush1.msra.mxu0 %v1293
    %1314 = vmatprep.subr.mxu0 0.0
    %1315 = vmatpush1.msra.mxu0 %v1294
    %1316 = vmatprep.subr.mxu0 0.0
    %1317 = vmatpush1.msra.mxu0 0.0
    %1318 = vmatprep.subr.mxu0 0.0
    %1319 = vmatpush1.msra.mxu0 0.0
    %1320 = vmatprep.subr.mxu0 0.0
    %1321 = vmatpush1.msra.mxu0 0.0
    %1322 = vmatprep.subr.mxu0 0.0
    %1323 = vmatpush1.msra.mxu0 0.0
    %1324 = vmatprep.subr.mxu0 0.0
    %1325 = vmatpush1.msra.mxu0 0.0
    %1326 = vmatprep.subr.mxu0 0.0
    %1327 = vmatpush1.msra.mxu0 0.0
    %1328 = vmatprep.subr.mxu0 0.0
    %1329 = vmatpush1.msra.mxu0 0.0
    %1330 = vmatprep.subr.mxu0 0.0
    %1331 = vmatpush1.msra.mxu0 0.0
    %1332 = vmatprep.subr.mxu0 0.0
    %1333 = vmatpush1.msra.mxu0 0.0
    %1334 = vmatprep.subr.mxu0 0.0
    %1335 = vmatpush1.msra.mxu0 0.0
    %1336 = vmatprep.subr.mxu0 0.0
    %1337 = vmatpush1.msra.mxu0 0.0
    %1338 = vmatprep.subr.mxu0 0.0
    %1339 = vmatpush1.msra.mxu0 0.0
    %1340 = vmatprep.subr.mxu0 0.0
    %1341 = vmatpush1.msra.mxu0 0.0
    %1342 = vmatprep.subr.mxu0 0.0
    %1343 = vmatpush1.msra.mxu0 0.0
    %1344 = vmatprep.subr.mxu0 0.0
    %1345 = vmatpush1.msra.mxu0 0.0
    %1346 = vmatprep.subr.mxu0 0.0
    %1347 = vmatpush1.msra.mxu0 0.0
    %1348 = vmatprep.subr.mxu0 0.0
    %1349 = vmatpush1.msra.mxu0 0.0
    %1350 = vmatprep.subr.mxu0 0.0
    %1351 = vmatpush1.msra.mxu0 0.0
    %1352 = vmatprep.subr.mxu0 0.0
    %1353 = vmatpush1.msra.mxu0 0.0
    %1354 = vmatprep.subr.mxu0 0.0
    %1355 = vmatpush1.msra.mxu0 0.0
    %1356 = vmatprep.subr.mxu0 0.0
    %1357 = vmatpush1.msra.mxu0 0.0
    %1358 = vmatprep.subr.mxu0 0.0
    %1359 = vmatpush1.msra.mxu0 0.0
    %1360 = vmatprep.subr.mxu0 0.0
    %1361 = vmatpush1.msra.mxu0 0.0
    %1362 = vmatprep.subr.mxu0 0.0
    %1363 = vmatpush1.msra.mxu0 0.0
    %1364 = vmatprep.subr.mxu0 0.0
    %1365 = vmatpush1.msra.mxu0 0.0
    %1366 = vmatprep.subr.mxu0 0.0
    %1367 = vmatpush1.msra.mxu0 0.0
    %1368 = vmatprep.subr.mxu0 0.0
    %1369 = vmatpush1.msra.mxu0 0.0
    %1370 = vmatprep.subr.mxu0 0.0
    %1371 = vmatpush1.msra.mxu0 0.0
    %1372 = vmatprep.mubr.f32.mxu0 0.0
    %1373 = vmatmul.mubr.f32.gmra.mrb[0].mxu0 %v1303
    %v1374 = vpop.f32.mrb[0].mxu0
    %v1375 = vadd.f32 %v1300, %v1374
    %v1376 = vpop.f32.mrb[0].mxu0
    %1377 = vmatprep.mubr.f32.mxu0 0.0
    %1378 = vmatmul.mubr.f32.gmra.mrb[0].mxu0 %v1306
    %v1379 = vpop.f32.mrb[0].mxu0
    %v1380 = vadd.f32 %v1300, %v1379
    %v1381 = vpop.f32.mrb[0].mxu0
    %1382 = vdwg.mxu0
    %1383 = vst.msk [vmem:[%s13] sm:$0xff] %vm683, %v1375
    %1384 = vst.msk [vmem:[%s13 + $0x8] sm:$0xff] %vm683, %v1380
    // Predicated region
    $region58: #{model_forward.1} parent=1 // pred_check
      _
    $region59: #{model_forward.1} parent=1 // pred_check_branch
      %1386 = sbr.rel (0) target = $region61
    $region60: #{model_forward.1} parent=1 // pred_region
      _
    $region61: #{model_forward.1} parent=1 // pred_fallthru
      _
    // Predicated region
    $region62: #{model_forward.1} parent=1 // pred_check
      _
    $region63: #{model_forward.1} parent=1 // pred_check_branch
      %1388 = sbr.rel (0) target = $region65
    $region64: #{model_forward.1} parent=1 // pred_region
      _
    $region65: #{model_forward.1} parent=1 // pred_fallthru
      _
    %1389 = vsyncpa [#allocation3], 1

</llo_original>
